<compile_context>
chip_gen: v7x
topology: tpu7x:2x2x1
jax: 0.10.0
libtpu: 0.0.40
codegen_flags: <defaults>
</compile_context>

<pallas_src>
import functools
import math

import numpy as np
import jax
import jax.numpy as jnp
from jax.experimental import pallas as pl
from jax.experimental.pallas import tpu as pltpu


def _block_kernel(x_ref, hw_ref, w_ref, b_ref, g_ref, sc_ref, sh_ref, o_ref,
                  *, H, W, eps):
    """One grid step = one (batch, depth-slice) pair.

    x_ref  : (1, Cin, HWp)   bf16 activations for this depth slice (lanes = H*W pad)
    hw_ref : (2, HWp)        int32 [row, col] index of every lane position
    w_ref  : (9, Cout, Cin)  bf16 conv taps, t = ky*3 + kx
    b_ref  : (Cout, 1)       conv bias (f32)
    g_ref  : (Cout, 1)       RMSNorm gain (f32)
    sc_ref, sh_ref : (1, Cout, 1)  FiLM scale / shift for this batch element (f32)
    o_ref  : (1, Cout, HWp)  output block (lane dense, channel major)
    """
    Cout = o_ref.shape[1]
    HWp = x_ref.shape[2]

    x = x_ref[0]                       # (Cin, HWp) bf16
    hwi = hw_ref[...]                  # (2, HWp) i32
    hh = hwi[0:1, :]                   # (1, HWp)
    ww = hwi[1:2, :]

    # Conv(1,3,3) with zero padding (0,1,1): 9 accumulating small MXU dots.
    # The halo / border masking is applied to the f32 dot result (masking columns of
    # the rhs commutes with the matmul), so no bf16 selects are needed.
    acc = jnp.zeros((Cout, HWp), jnp.float32)
    for t in range(9):
        oy, ox = t // 3 - 1, t % 3 - 1
        s = oy * W + ox                 # flattened lane offset of this tap
        # out[q] needs x[q + s]; static roll lowers to lane slices/rotate (XLU).
        shifted = x if s == 0 else jnp.roll(x, -s, axis=1)
        pt = jnp.dot(w_ref[t], shifted, preferred_element_type=jnp.float32)
        valid = ((hh >= -oy) & (hh < H - oy) &
                 (ww >= -ox) & (ww < W - ox))          # (1, HWp) border validity
        acc = acc + jnp.where(valid, pt, 0.0)

    acc = acc + b_ref[...]              # conv bias

    # RMSNorm over channels: x / max(||x||_c, eps) * sqrt(C) * g
    ssq = jnp.sum(acc * acc, axis=0, keepdims=True)     # (1, HWp)
    inv = jnp.minimum(jax.lax.rsqrt(ssq), 1.0 / eps)    # == 1 / max(sqrt(ssq), eps)
    y = acc * (inv * math.sqrt(Cout)) * g_ref[...]

    # FiLM modulation (identity when scale/shift are zeros) + SiLU.
    y = y * (sc_ref[0] + 1.0) + sh_ref[0]
    y = y * jax.nn.sigmoid(y)

    o_ref[0] = y.astype(o_ref.dtype)


def block_forward(x, w, b, g, scale=None, shift=None, eps=1e-12):
    """Forward pass of `Block`.

    x            : [B, Cin, D, H, W]     (NCDHW, like the PyTorch module)
    w            : [Cout, Cin, 1, 3, 3]  Conv3d weight
    b, g         : [Cout]                Conv3d bias, RMSNorm gain
    scale, shift : optional [B, Cout] (or [B, Cout, 1, 1, 1]) FiLM parameters
    returns      : [B, Cout, D, H, W]
    """
    B, Cin, D, H, W = x.shape
    Cout = w.shape[0]
    HW = H * W
    HWp = ((HW + 127) // 128) * 128     # lane extent per depth slice (128-aligned)

    # Free (contiguous) reshapes; pad lanes only if H*W is not 128-aligned.
    xf = x.reshape(B, Cin, D, HW)
    if HWp != HW:
        xf = jnp.pad(xf, ((0, 0), (0, 0), (0, 0), (0, HWp - HW)))
    xf = xf.reshape(B, Cin, D * HWp).astype(jnp.bfloat16)

    # Conv weight as (9, Cout, Cin) bf16 taps, tap index t = ky*3 + kx.
    wk = jnp.transpose(w[:, :, 0, :, :], (2, 3, 0, 1)).reshape(9, Cout, Cin)
    wk = wk.astype(jnp.bfloat16)

    # (row, col) index of every lane position (tiny, constant across the grid).
    q = np.arange(HWp)
    hw_idx = jnp.asarray(np.stack([q // W, q % W]).astype(np.int32))     # (2, HWp)

    b2 = b.reshape(Cout, 1).astype(jnp.float32)
    g2 = g.reshape(Cout, 1).astype(jnp.float32)
    if scale is None:
        sc = jnp.zeros((B, Cout, 1), jnp.float32)
        sh = jnp.zeros((B, Cout, 1), jnp.float32)
    else:
        sc = scale.reshape(B, Cout, 1).astype(jnp.float32)
        sh = shift.reshape(B, Cout, 1).astype(jnp.float32)

    kern = functools.partial(_block_kernel, H=H, W=W, eps=float(eps))

    out = pl.pallas_call(
        kern,
        out_shape=jax.ShapeDtypeStruct((B, Cout, D * HWp), x.dtype),
        grid_spec=pltpu.PrefetchScalarGridSpec(
            num_scalar_prefetch=0,
            grid=(B, D),
            in_specs=[
                pl.BlockSpec((1, Cin, HWp), lambda bi, di: (bi, 0, di)),   # x slice
                pl.BlockSpec((2, HWp), lambda bi, di: (0, 0)),             # (row,col) idx
                pl.BlockSpec((9, Cout, Cin), lambda bi, di: (0, 0, 0)),    # conv taps
                pl.BlockSpec((Cout, 1), lambda bi, di: (0, 0)),            # conv bias
                pl.BlockSpec((Cout, 1), lambda bi, di: (0, 0)),            # RMSNorm gain
                pl.BlockSpec((1, Cout, 1), lambda bi, di: (bi, 0, 0)),     # FiLM scale
                pl.BlockSpec((1, Cout, 1), lambda bi, di: (bi, 0, 0)),     # FiLM shift
            ],
            out_specs=pl.BlockSpec((1, Cout, HWp), lambda bi, di: (bi, 0, di)),
        ),
        compiler_params=pltpu.CompilerParams(
            dimension_semantics=("parallel", "parallel"),
        ),
    )(xf, hw_idx, wk, b2, g2, sc, sh)

    # Free reshape back to NCDHW (slice off lane padding only if it was added).
    out = out.reshape(B, Cout, D, HWp)
    if HWp != HW:
        out = out[..., :HW]
    return out.reshape(B, Cout, D, H, W)


def _reference(x, w, b, g, scale, shift, eps=1e-12):
    """Pure-JAX reference mirroring the PyTorch forward (for the self-check)."""
    y = jax.lax.conv_general_dilated(
        x, w, window_strides=(1, 1, 1),
        padding=((0, 0), (1, 1), (1, 1)),
        dimension_numbers=("NCDHW", "OIDHW", "NCDHW"))
    y = y + b.reshape(1, -1, 1, 1, 1)
    C = y.shape[1]
    norm = jnp.sqrt(jnp.sum(y * y, axis=1, keepdims=True))
    y = y / jnp.maximum(norm, eps) * jnp.sqrt(jnp.float32(C)) * g.reshape(1, -1, 1, 1, 1)
    y = y * (scale.reshape(scale.shape[0], -1, 1, 1, 1) + 1.0) + \
        shift.reshape(shift.shape[0], -1, 1, 1, 1)
    return y * jax.nn.sigmoid(y)


if __name__ == "__main__":
    B, Cin, Cout, D, H, W = 2, 4, 8, 3, 16, 16

    key = jax.random.PRNGKey(0)
    kx, kw, kb, ks, kh = jax.random.split(key, 5)

    x = jax.random.normal(kx, (B, Cin, D, H, W), jnp.float32)
    w = jax.random.normal(kw, (Cout, Cin, 1, 3, 3), jnp.float32) * 0.1  # Conv3d weight
    b = jax.random.normal(kb, (Cout,), jnp.float32) * 0.1               # Conv3d bias
    g = jnp.ones((Cout,), jnp.float32)                                  # RMSNorm gain
    scale = jax.random.normal(ks, (B, Cout), jnp.float32) * 0.1
    shift = jax.random.normal(kh, (B, Cout), jnp.float32) * 0.1

    # Round the conv operands to bf16-representable values so the bf16 MXU path and
    # the XLA reference conv compute exact products; residual differences are f32
    # accumulation-order only.
    x = x.astype(jnp.bfloat16).astype(jnp.float32)
    w = w.astype(jnp.bfloat16).astype(jnp.float32)

    out = jax.block_until_ready(block_forward(x, w, b, g, scale, shift))
    ref = _reference(x, w, b, g, scale, shift)
    assert out.shape == (B, Cout, D, H, W)
    err = float(jnp.max(jnp.abs(out - ref)))
    assert err < 2e-3, f"max abs error vs reference: {err}"

    # also exercise the scale_shift=None path
    out2 = jax.block_until_ready(block_forward(x, w, b, g))
    ref2 = _reference(x, w, b, g, jnp.zeros((B, Cout)), jnp.zeros((B, Cout)))
    assert out2.shape == (B, Cout, D, H, W)
    err2 = float(jnp.max(jnp.abs(out2 - ref2)))
    assert err2 < 2e-3, f"max abs error (no scale_shift) vs reference: {err2}"

    print("KERNEL_OK")
</pallas_src>

<mosaic_0001>
module attributes {stable_mosaic.version = 11 : i64} {
  func.func @_block_kernel(%arg0: i32, %arg1: i32, %arg2: memref<1x4x256xbf16, #tpu.memory_space<vmem>>, %arg3: memref<2x256xi32, #tpu.memory_space<vmem>>, %arg4: memref<9x8x4xbf16, #tpu.memory_space<vmem>>, %arg5: memref<8x1xf32, #tpu.memory_space<vmem>>, %arg6: memref<8x1xf32, #tpu.memory_space<vmem>>, %arg7: memref<1x8x1xf32, #tpu.memory_space<vmem>>, %arg8: memref<1x8x1xf32, #tpu.memory_space<vmem>>, %arg9: memref<1x8x256xf32, #tpu.memory_space<vmem>>) attributes {dimension_semantics = [#tpu.dimension_semantics<parallel>, #tpu.dimension_semantics<parallel>], iteration_bounds = array<i64: 2, 3>, scalar_prefetch = 0 : i64, scratch_operands = 0 : i64, tpu.core_type = #tpu.core_type<tc>, window_params = [{transform_indices = @transform_0, window_bounds = array<i64: 1, 4, 256>}, {pipeline_mode = #tpu.pipeline_mode<synchronous>, transform_indices = @transform_1, window_bounds = array<i64: 2, 256>}, {pipeline_mode = #tpu.pipeline_mode<synchronous>, transform_indices = @transform_2, window_bounds = array<i64: 9, 8, 4>}, {pipeline_mode = #tpu.pipeline_mode<synchronous>, transform_indices = @transform_3, window_bounds = array<i64: 8, 1>}, {pipeline_mode = #tpu.pipeline_mode<synchronous>, transform_indices = @transform_4, window_bounds = array<i64: 8, 1>}, {transform_indices = @transform_5, window_bounds = array<i64: 1, 8, 1>}, {transform_indices = @transform_6, window_bounds = array<i64: 1, 8, 1>}, {transform_indices = @transform_7, window_bounds = array<i64: 1, 8, 256>}]} {
    %c0 = arith.constant 0 : index
    %c0_0 = arith.constant 0 : index
    %c0_1 = arith.constant 0 : index
    %0 = vector.load %arg2[%c0, %c0_0, %c0_1] : memref<1x4x256xbf16, #tpu.memory_space<vmem>>, vector<1x4x256xbf16>
    %1 = vector.shape_cast %0 : vector<1x4x256xbf16> to vector<4x256xbf16>
    %c0_2 = arith.constant 0 : index
    %c0_3 = arith.constant 0 : index
    %2 = vector.load %arg3[%c0_2, %c0_3] : memref<2x256xi32, #tpu.memory_space<vmem>>, vector<2x256xi32>
    %3 = vector.extract_strided_slice %2 {offsets = [0, 0], sizes = [1, 256], strides = [1, 1]} : vector<2x256xi32> to vector<1x256xi32>
    %4 = vector.extract_strided_slice %2 {offsets = [1, 0], sizes = [1, 256], strides = [1, 1]} : vector<2x256xi32> to vector<1x256xi32>
    %cst = arith.constant 0.000000e+00 : f32
    %5 = vector.broadcast %cst : f32 to vector<8x256xf32>
    %6 = vector.extract_strided_slice %1 {offsets = [0, 239], sizes = [4, 17], strides = [1, 1]} : vector<4x256xbf16> to vector<4x17xbf16>
    %7 = vector.extract_strided_slice %1 {offsets = [0, 0], sizes = [4, 239], strides = [1, 1]} : vector<4x256xbf16> to vector<4x239xbf16>
    %8 = tpu.concatenate %6, %7 in 1 : vector<4x17xbf16>, vector<4x239xbf16> -> vector<4x256xbf16>
    %c0_4 = arith.constant 0 : index
    %c0_5 = arith.constant 0 : index
    %c0_6 = arith.constant 0 : index
    %9 = vector.load %arg4[%c0_4, %c0_5, %c0_6] : memref<9x8x4xbf16, #tpu.memory_space<vmem>>, vector<1x8x4xbf16>
    %10 = vector.shape_cast %9 : vector<1x8x4xbf16> to vector<8x4xbf16>
    %cst_7 = arith.constant dense<0.000000e+00> : vector<8x256xf32>
    %11 = tpu.matmul %10, %8, %cst_7 {dimension_numbers = #tpu.dot_dimension_numbers<[1], [0], [0], [1], [0, 0, 1, 1], [], []>} : vector<8x4xbf16>, vector<4x256xbf16>, vector<8x256xf32> -> vector<8x256xf32>
    %c1_i32 = arith.constant 1 : i32
    %12 = vector.broadcast %c1_i32 : i32 to vector<1x256xi32>
    %13 = arith.cmpi sge, %3, %12 : vector<1x256xi32>
    %c17_i32 = arith.constant 17 : i32
    %14 = vector.broadcast %c17_i32 : i32 to vector<1x256xi32>
    %15 = arith.cmpi slt, %3, %14 : vector<1x256xi32>
    %16 = arith.andi %13, %15 : vector<1x256xi1>
    %c1_i32_8 = arith.constant 1 : i32
    %17 = vector.broadcast %c1_i32_8 : i32 to vector<1x256xi32>
    %18 = arith.cmpi sge, %4, %17 : vector<1x256xi32>
    %19 = arith.andi %16, %18 : vector<1x256xi1>
    %c17_i32_9 = arith.constant 17 : i32
    %20 = vector.broadcast %c17_i32_9 : i32 to vector<1x256xi32>
    %21 = arith.cmpi slt, %4, %20 : vector<1x256xi32>
    %22 = arith.andi %19, %21 : vector<1x256xi1>
    %cst_10 = arith.constant 0.000000e+00 : f32
    %23 = vector.shape_cast %22 : vector<1x256xi1> to vector<1x256xi1>
    %24 = vector.broadcast %23 : vector<1x256xi1> to vector<8x256xi1>
    %25 = vector.broadcast %cst_10 : f32 to vector<8x256xf32>
    %26 = arith.select %24, %11, %25 : vector<8x256xi1>, vector<8x256xf32>
    %27 = arith.addf %5, %26 : vector<8x256xf32>
    %28 = vector.extract_strided_slice %1 {offsets = [0, 240], sizes = [4, 16], strides = [1, 1]} : vector<4x256xbf16> to vector<4x16xbf16>
    %29 = vector.extract_strided_slice %1 {offsets = [0, 0], sizes = [4, 240], strides = [1, 1]} : vector<4x256xbf16> to vector<4x240xbf16>
    %30 = tpu.concatenate %28, %29 in 1 : vector<4x16xbf16>, vector<4x240xbf16> -> vector<4x256xbf16>
    %c1 = arith.constant 1 : index
    %c0_11 = arith.constant 0 : index
    %c0_12 = arith.constant 0 : index
    %31 = vector.load %arg4[%c1, %c0_11, %c0_12] : memref<9x8x4xbf16, #tpu.memory_space<vmem>>, vector<1x8x4xbf16>
    %32 = vector.shape_cast %31 : vector<1x8x4xbf16> to vector<8x4xbf16>
    %cst_13 = arith.constant dense<0.000000e+00> : vector<8x256xf32>
    %33 = tpu.matmul %32, %30, %cst_13 {dimension_numbers = #tpu.dot_dimension_numbers<[1], [0], [0], [1], [0, 0, 1, 1], [], []>} : vector<8x4xbf16>, vector<4x256xbf16>, vector<8x256xf32> -> vector<8x256xf32>
    %c1_i32_14 = arith.constant 1 : i32
    %34 = vector.broadcast %c1_i32_14 : i32 to vector<1x256xi32>
    %35 = arith.cmpi sge, %3, %34 : vector<1x256xi32>
    %c17_i32_15 = arith.constant 17 : i32
    %36 = vector.broadcast %c17_i32_15 : i32 to vector<1x256xi32>
    %37 = arith.cmpi slt, %3, %36 : vector<1x256xi32>
    %38 = arith.andi %35, %37 : vector<1x256xi1>
    %c0_i32 = arith.constant 0 : i32
    %39 = vector.broadcast %c0_i32 : i32 to vector<1x256xi32>
    %40 = arith.cmpi sge, %4, %39 : vector<1x256xi32>
    %41 = arith.andi %38, %40 : vector<1x256xi1>
    %c16_i32 = arith.constant 16 : i32
    %42 = vector.broadcast %c16_i32 : i32 to vector<1x256xi32>
    %43 = arith.cmpi slt, %4, %42 : vector<1x256xi32>
    %44 = arith.andi %41, %43 : vector<1x256xi1>
    %cst_16 = arith.constant 0.000000e+00 : f32
    %45 = vector.shape_cast %44 : vector<1x256xi1> to vector<1x256xi1>
    %46 = vector.broadcast %45 : vector<1x256xi1> to vector<8x256xi1>
    %47 = vector.broadcast %cst_16 : f32 to vector<8x256xf32>
    %48 = arith.select %46, %33, %47 : vector<8x256xi1>, vector<8x256xf32>
    %49 = arith.addf %27, %48 : vector<8x256xf32>
    %50 = vector.extract_strided_slice %1 {offsets = [0, 241], sizes = [4, 15], strides = [1, 1]} : vector<4x256xbf16> to vector<4x15xbf16>
    %51 = vector.extract_strided_slice %1 {offsets = [0, 0], sizes = [4, 241], strides = [1, 1]} : vector<4x256xbf16> to vector<4x241xbf16>
    %52 = tpu.concatenate %50, %51 in 1 : vector<4x15xbf16>, vector<4x241xbf16> -> vector<4x256xbf16>
    %c2 = arith.constant 2 : index
    %c0_17 = arith.constant 0 : index
    %c0_18 = arith.constant 0 : index
    %53 = vector.load %arg4[%c2, %c0_17, %c0_18] : memref<9x8x4xbf16, #tpu.memory_space<vmem>>, vector<1x8x4xbf16>
    %54 = vector.shape_cast %53 : vector<1x8x4xbf16> to vector<8x4xbf16>
    %cst_19 = arith.constant dense<0.000000e+00> : vector<8x256xf32>
    %55 = tpu.matmul %54, %52, %cst_19 {dimension_numbers = #tpu.dot_dimension_numbers<[1], [0], [0], [1], [0, 0, 1, 1], [], []>} : vector<8x4xbf16>, vector<4x256xbf16>, vector<8x256xf32> -> vector<8x256xf32>
    %c1_i32_20 = arith.constant 1 : i32
    %56 = vector.broadcast %c1_i32_20 : i32 to vector<1x256xi32>
    %57 = arith.cmpi sge, %3, %56 : vector<1x256xi32>
    %c17_i32_21 = arith.constant 17 : i32
    %58 = vector.broadcast %c17_i32_21 : i32 to vector<1x256xi32>
    %59 = arith.cmpi slt, %3, %58 : vector<1x256xi32>
    %60 = arith.andi %57, %59 : vector<1x256xi1>
    %c-1_i32 = arith.constant -1 : i32
    %61 = vector.broadcast %c-1_i32 : i32 to vector<1x256xi32>
    %62 = arith.cmpi sge, %4, %61 : vector<1x256xi32>
    %63 = arith.andi %60, %62 : vector<1x256xi1>
    %c15_i32 = arith.constant 15 : i32
    %64 = vector.broadcast %c15_i32 : i32 to vector<1x256xi32>
    %65 = arith.cmpi slt, %4, %64 : vector<1x256xi32>
    %66 = arith.andi %63, %65 : vector<1x256xi1>
    %cst_22 = arith.constant 0.000000e+00 : f32
    %67 = vector.shape_cast %66 : vector<1x256xi1> to vector<1x256xi1>
    %68 = vector.broadcast %67 : vector<1x256xi1> to vector<8x256xi1>
    %69 = vector.broadcast %cst_22 : f32 to vector<8x256xf32>
    %70 = arith.select %68, %55, %69 : vector<8x256xi1>, vector<8x256xf32>
    %71 = arith.addf %49, %70 : vector<8x256xf32>
    %72 = vector.extract_strided_slice %1 {offsets = [0, 255], sizes = [4, 1], strides = [1, 1]} : vector<4x256xbf16> to vector<4x1xbf16>
    %73 = vector.extract_strided_slice %1 {offsets = [0, 0], sizes = [4, 255], strides = [1, 1]} : vector<4x256xbf16> to vector<4x255xbf16>
    %74 = tpu.concatenate %72, %73 in 1 : vector<4x1xbf16>, vector<4x255xbf16> -> vector<4x256xbf16>
    %c3 = arith.constant 3 : index
    %c0_23 = arith.constant 0 : index
    %c0_24 = arith.constant 0 : index
    %75 = vector.load %arg4[%c3, %c0_23, %c0_24] : memref<9x8x4xbf16, #tpu.memory_space<vmem>>, vector<1x8x4xbf16>
    %76 = vector.shape_cast %75 : vector<1x8x4xbf16> to vector<8x4xbf16>
    %cst_25 = arith.constant dense<0.000000e+00> : vector<8x256xf32>
    %77 = tpu.matmul %76, %74, %cst_25 {dimension_numbers = #tpu.dot_dimension_numbers<[1], [0], [0], [1], [0, 0, 1, 1], [], []>} : vector<8x4xbf16>, vector<4x256xbf16>, vector<8x256xf32> -> vector<8x256xf32>
    %c0_i32_26 = arith.constant 0 : i32
    %78 = vector.broadcast %c0_i32_26 : i32 to vector<1x256xi32>
    %79 = arith.cmpi sge, %3, %78 : vector<1x256xi32>
    %c16_i32_27 = arith.constant 16 : i32
    %80 = vector.broadcast %c16_i32_27 : i32 to vector<1x256xi32>
    %81 = arith.cmpi slt, %3, %80 : vector<1x256xi32>
    %82 = arith.andi %79, %81 : vector<1x256xi1>
    %c1_i32_28 = arith.constant 1 : i32
    %83 = vector.broadcast %c1_i32_28 : i32 to vector<1x256xi32>
    %84 = arith.cmpi sge, %4, %83 : vector<1x256xi32>
    %85 = arith.andi %82, %84 : vector<1x256xi1>
    %c17_i32_29 = arith.constant 17 : i32
    %86 = vector.broadcast %c17_i32_29 : i32 to vector<1x256xi32>
    %87 = arith.cmpi slt, %4, %86 : vector<1x256xi32>
    %88 = arith.andi %85, %87 : vector<1x256xi1>
    %cst_30 = arith.constant 0.000000e+00 : f32
    %89 = vector.shape_cast %88 : vector<1x256xi1> to vector<1x256xi1>
    %90 = vector.broadcast %89 : vector<1x256xi1> to vector<8x256xi1>
    %91 = vector.broadcast %cst_30 : f32 to vector<8x256xf32>
    %92 = arith.select %90, %77, %91 : vector<8x256xi1>, vector<8x256xf32>
    %93 = arith.addf %71, %92 : vector<8x256xf32>
    %c4 = arith.constant 4 : index
    %c0_31 = arith.constant 0 : index
    %c0_32 = arith.constant 0 : index
    %94 = vector.load %arg4[%c4, %c0_31, %c0_32] : memref<9x8x4xbf16, #tpu.memory_space<vmem>>, vector<1x8x4xbf16>
    %95 = vector.shape_cast %94 : vector<1x8x4xbf16> to vector<8x4xbf16>
    %cst_33 = arith.constant dense<0.000000e+00> : vector<8x256xf32>
    %96 = tpu.matmul %95, %1, %cst_33 {dimension_numbers = #tpu.dot_dimension_numbers<[1], [0], [0], [1], [0, 0, 1, 1], [], []>} : vector<8x4xbf16>, vector<4x256xbf16>, vector<8x256xf32> -> vector<8x256xf32>
    %c0_i32_34 = arith.constant 0 : i32
    %97 = vector.broadcast %c0_i32_34 : i32 to vector<1x256xi32>
    %98 = arith.cmpi sge, %3, %97 : vector<1x256xi32>
    %c16_i32_35 = arith.constant 16 : i32
    %99 = vector.broadcast %c16_i32_35 : i32 to vector<1x256xi32>
    %100 = arith.cmpi slt, %3, %99 : vector<1x256xi32>
    %101 = arith.andi %98, %100 : vector<1x256xi1>
    %c0_i32_36 = arith.constant 0 : i32
    %102 = vector.broadcast %c0_i32_36 : i32 to vector<1x256xi32>
    %103 = arith.cmpi sge, %4, %102 : vector<1x256xi32>
    %104 = arith.andi %101, %103 : vector<1x256xi1>
    %c16_i32_37 = arith.constant 16 : i32
    %105 = vector.broadcast %c16_i32_37 : i32 to vector<1x256xi32>
    %106 = arith.cmpi slt, %4, %105 : vector<1x256xi32>
    %107 = arith.andi %104, %106 : vector<1x256xi1>
    %cst_38 = arith.constant 0.000000e+00 : f32
    %108 = vector.shape_cast %107 : vector<1x256xi1> to vector<1x256xi1>
    %109 = vector.broadcast %108 : vector<1x256xi1> to vector<8x256xi1>
    %110 = vector.broadcast %cst_38 : f32 to vector<8x256xf32>
    %111 = arith.select %109, %96, %110 : vector<8x256xi1>, vector<8x256xf32>
    %112 = arith.addf %93, %111 : vector<8x256xf32>
    %113 = vector.extract_strided_slice %1 {offsets = [0, 1], sizes = [4, 255], strides = [1, 1]} : vector<4x256xbf16> to vector<4x255xbf16>
    %114 = vector.extract_strided_slice %1 {offsets = [0, 0], sizes = [4, 1], strides = [1, 1]} : vector<4x256xbf16> to vector<4x1xbf16>
    %115 = tpu.concatenate %113, %114 in 1 : vector<4x255xbf16>, vector<4x1xbf16> -> vector<4x256xbf16>
    %c5 = arith.constant 5 : index
    %c0_39 = arith.constant 0 : index
    %c0_40 = arith.constant 0 : index
    %116 = vector.load %arg4[%c5, %c0_39, %c0_40] : memref<9x8x4xbf16, #tpu.memory_space<vmem>>, vector<1x8x4xbf16>
    %117 = vector.shape_cast %116 : vector<1x8x4xbf16> to vector<8x4xbf16>
    %cst_41 = arith.constant dense<0.000000e+00> : vector<8x256xf32>
    %118 = tpu.matmul %117, %115, %cst_41 {dimension_numbers = #tpu.dot_dimension_numbers<[1], [0], [0], [1], [0, 0, 1, 1], [], []>} : vector<8x4xbf16>, vector<4x256xbf16>, vector<8x256xf32> -> vector<8x256xf32>
    %c0_i32_42 = arith.constant 0 : i32
    %119 = vector.broadcast %c0_i32_42 : i32 to vector<1x256xi32>
    %120 = arith.cmpi sge, %3, %119 : vector<1x256xi32>
    %c16_i32_43 = arith.constant 16 : i32
    %121 = vector.broadcast %c16_i32_43 : i32 to vector<1x256xi32>
    %122 = arith.cmpi slt, %3, %121 : vector<1x256xi32>
    %123 = arith.andi %120, %122 : vector<1x256xi1>
    %c-1_i32_44 = arith.constant -1 : i32
    %124 = vector.broadcast %c-1_i32_44 : i32 to vector<1x256xi32>
    %125 = arith.cmpi sge, %4, %124 : vector<1x256xi32>
    %126 = arith.andi %123, %125 : vector<1x256xi1>
    %c15_i32_45 = arith.constant 15 : i32
    %127 = vector.broadcast %c15_i32_45 : i32 to vector<1x256xi32>
    %128 = arith.cmpi slt, %4, %127 : vector<1x256xi32>
    %129 = arith.andi %126, %128 : vector<1x256xi1>
    %cst_46 = arith.constant 0.000000e+00 : f32
    %130 = vector.shape_cast %129 : vector<1x256xi1> to vector<1x256xi1>
    %131 = vector.broadcast %130 : vector<1x256xi1> to vector<8x256xi1>
    %132 = vector.broadcast %cst_46 : f32 to vector<8x256xf32>
    %133 = arith.select %131, %118, %132 : vector<8x256xi1>, vector<8x256xf32>
    %134 = arith.addf %112, %133 : vector<8x256xf32>
    %135 = vector.extract_strided_slice %1 {offsets = [0, 15], sizes = [4, 241], strides = [1, 1]} : vector<4x256xbf16> to vector<4x241xbf16>
    %136 = vector.extract_strided_slice %1 {offsets = [0, 0], sizes = [4, 15], strides = [1, 1]} : vector<4x256xbf16> to vector<4x15xbf16>
    %137 = tpu.concatenate %135, %136 in 1 : vector<4x241xbf16>, vector<4x15xbf16> -> vector<4x256xbf16>
    %c6 = arith.constant 6 : index
    %c0_47 = arith.constant 0 : index
    %c0_48 = arith.constant 0 : index
    %138 = vector.load %arg4[%c6, %c0_47, %c0_48] : memref<9x8x4xbf16, #tpu.memory_space<vmem>>, vector<1x8x4xbf16>
    %139 = vector.shape_cast %138 : vector<1x8x4xbf16> to vector<8x4xbf16>
    %cst_49 = arith.constant dense<0.000000e+00> : vector<8x256xf32>
    %140 = tpu.matmul %139, %137, %cst_49 {dimension_numbers = #tpu.dot_dimension_numbers<[1], [0], [0], [1], [0, 0, 1, 1], [], []>} : vector<8x4xbf16>, vector<4x256xbf16>, vector<8x256xf32> -> vector<8x256xf32>
    %c-1_i32_50 = arith.constant -1 : i32
    %141 = vector.broadcast %c-1_i32_50 : i32 to vector<1x256xi32>
    %142 = arith.cmpi sge, %3, %141 : vector<1x256xi32>
    %c15_i32_51 = arith.constant 15 : i32
    %143 = vector.broadcast %c15_i32_51 : i32 to vector<1x256xi32>
    %144 = arith.cmpi slt, %3, %143 : vector<1x256xi32>
    %145 = arith.andi %142, %144 : vector<1x256xi1>
    %c1_i32_52 = arith.constant 1 : i32
    %146 = vector.broadcast %c1_i32_52 : i32 to vector<1x256xi32>
    %147 = arith.cmpi sge, %4, %146 : vector<1x256xi32>
    %148 = arith.andi %145, %147 : vector<1x256xi1>
    %c17_i32_53 = arith.constant 17 : i32
    %149 = vector.broadcast %c17_i32_53 : i32 to vector<1x256xi32>
    %150 = arith.cmpi slt, %4, %149 : vector<1x256xi32>
    %151 = arith.andi %148, %150 : vector<1x256xi1>
    %cst_54 = arith.constant 0.000000e+00 : f32
    %152 = vector.shape_cast %151 : vector<1x256xi1> to vector<1x256xi1>
    %153 = vector.broadcast %152 : vector<1x256xi1> to vector<8x256xi1>
    %154 = vector.broadcast %cst_54 : f32 to vector<8x256xf32>
    %155 = arith.select %153, %140, %154 : vector<8x256xi1>, vector<8x256xf32>
    %156 = arith.addf %134, %155 : vector<8x256xf32>
    %157 = vector.extract_strided_slice %1 {offsets = [0, 16], sizes = [4, 240], strides = [1, 1]} : vector<4x256xbf16> to vector<4x240xbf16>
    %158 = vector.extract_strided_slice %1 {offsets = [0, 0], sizes = [4, 16], strides = [1, 1]} : vector<4x256xbf16> to vector<4x16xbf16>
    %159 = tpu.concatenate %157, %158 in 1 : vector<4x240xbf16>, vector<4x16xbf16> -> vector<4x256xbf16>
    %c7 = arith.constant 7 : index
    %c0_55 = arith.constant 0 : index
    %c0_56 = arith.constant 0 : index
    %160 = vector.load %arg4[%c7, %c0_55, %c0_56] : memref<9x8x4xbf16, #tpu.memory_space<vmem>>, vector<1x8x4xbf16>
    %161 = vector.shape_cast %160 : vector<1x8x4xbf16> to vector<8x4xbf16>
    %cst_57 = arith.constant dense<0.000000e+00> : vector<8x256xf32>
    %162 = tpu.matmul %161, %159, %cst_57 {dimension_numbers = #tpu.dot_dimension_numbers<[1], [0], [0], [1], [0, 0, 1, 1], [], []>} : vector<8x4xbf16>, vector<4x256xbf16>, vector<8x256xf32> -> vector<8x256xf32>
    %c-1_i32_58 = arith.constant -1 : i32
    %163 = vector.broadcast %c-1_i32_58 : i32 to vector<1x256xi32>
    %164 = arith.cmpi sge, %3, %163 : vector<1x256xi32>
    %c15_i32_59 = arith.constant 15 : i32
    %165 = vector.broadcast %c15_i32_59 : i32 to vector<1x256xi32>
    %166 = arith.cmpi slt, %3, %165 : vector<1x256xi32>
    %167 = arith.andi %164, %166 : vector<1x256xi1>
    %c0_i32_60 = arith.constant 0 : i32
    %168 = vector.broadcast %c0_i32_60 : i32 to vector<1x256xi32>
    %169 = arith.cmpi sge, %4, %168 : vector<1x256xi32>
    %170 = arith.andi %167, %169 : vector<1x256xi1>
    %c16_i32_61 = arith.constant 16 : i32
    %171 = vector.broadcast %c16_i32_61 : i32 to vector<1x256xi32>
    %172 = arith.cmpi slt, %4, %171 : vector<1x256xi32>
    %173 = arith.andi %170, %172 : vector<1x256xi1>
    %cst_62 = arith.constant 0.000000e+00 : f32
    %174 = vector.shape_cast %173 : vector<1x256xi1> to vector<1x256xi1>
    %175 = vector.broadcast %174 : vector<1x256xi1> to vector<8x256xi1>
    %176 = vector.broadcast %cst_62 : f32 to vector<8x256xf32>
    %177 = arith.select %175, %162, %176 : vector<8x256xi1>, vector<8x256xf32>
    %178 = arith.addf %156, %177 : vector<8x256xf32>
    %179 = vector.extract_strided_slice %1 {offsets = [0, 17], sizes = [4, 239], strides = [1, 1]} : vector<4x256xbf16> to vector<4x239xbf16>
    %180 = vector.extract_strided_slice %1 {offsets = [0, 0], sizes = [4, 17], strides = [1, 1]} : vector<4x256xbf16> to vector<4x17xbf16>
    %181 = tpu.concatenate %179, %180 in 1 : vector<4x239xbf16>, vector<4x17xbf16> -> vector<4x256xbf16>
    %c8 = arith.constant 8 : index
    %c0_63 = arith.constant 0 : index
    %c0_64 = arith.constant 0 : index
    %182 = vector.load %arg4[%c8, %c0_63, %c0_64] : memref<9x8x4xbf16, #tpu.memory_space<vmem>>, vector<1x8x4xbf16>
    %183 = vector.shape_cast %182 : vector<1x8x4xbf16> to vector<8x4xbf16>
    %cst_65 = arith.constant dense<0.000000e+00> : vector<8x256xf32>
    %184 = tpu.matmul %183, %181, %cst_65 {dimension_numbers = #tpu.dot_dimension_numbers<[1], [0], [0], [1], [0, 0, 1, 1], [], []>} : vector<8x4xbf16>, vector<4x256xbf16>, vector<8x256xf32> -> vector<8x256xf32>
    %c-1_i32_66 = arith.constant -1 : i32
    %185 = vector.broadcast %c-1_i32_66 : i32 to vector<1x256xi32>
    %186 = arith.cmpi sge, %3, %185 : vector<1x256xi32>
    %c15_i32_67 = arith.constant 15 : i32
    %187 = vector.broadcast %c15_i32_67 : i32 to vector<1x256xi32>
    %188 = arith.cmpi slt, %3, %187 : vector<1x256xi32>
    %189 = arith.andi %186, %188 : vector<1x256xi1>
    %c-1_i32_68 = arith.constant -1 : i32
    %190 = vector.broadcast %c-1_i32_68 : i32 to vector<1x256xi32>
    %191 = arith.cmpi sge, %4, %190 : vector<1x256xi32>
    %192 = arith.andi %189, %191 : vector<1x256xi1>
    %c15_i32_69 = arith.constant 15 : i32
    %193 = vector.broadcast %c15_i32_69 : i32 to vector<1x256xi32>
    %194 = arith.cmpi slt, %4, %193 : vector<1x256xi32>
    %195 = arith.andi %192, %194 : vector<1x256xi1>
    %cst_70 = arith.constant 0.000000e+00 : f32
    %196 = vector.shape_cast %195 : vector<1x256xi1> to vector<1x256xi1>
    %197 = vector.broadcast %196 : vector<1x256xi1> to vector<8x256xi1>
    %198 = vector.broadcast %cst_70 : f32 to vector<8x256xf32>
    %199 = arith.select %197, %184, %198 : vector<8x256xi1>, vector<8x256xf32>
    %200 = arith.addf %178, %199 : vector<8x256xf32>
    %c0_71 = arith.constant 0 : index
    %c0_72 = arith.constant 0 : index
    %201 = vector.load %arg5[%c0_71, %c0_72] : memref<8x1xf32, #tpu.memory_space<vmem>>, vector<8x1xf32>
    %202 = vector.broadcast %201 : vector<8x1xf32> to vector<8x256xf32>
    %203 = arith.addf %200, %202 : vector<8x256xf32>
    %204 = arith.mulf %203, %203 : vector<8x256xf32>
    %cst_73 = arith.constant dense<0.000000e+00> : vector<256xf32>
    %205 = vector.multi_reduction <add>, %204, %cst_73 [0] : vector<8x256xf32> to vector<256xf32>
    %206 = vector.shape_cast %205 : vector<256xf32> to vector<1x256xf32>
    %207 = math.rsqrt %206 : vector<1x256xf32>
    %cst_74 = arith.constant 9.99999995E+11 : f32
    %208 = vector.broadcast %cst_74 : f32 to vector<1x256xf32>
    %209 = arith.minimumf %207, %208 : vector<1x256xf32>
    %cst_75 = arith.constant 2.82842708 : f32
    %210 = vector.broadcast %cst_75 : f32 to vector<1x256xf32>
    %211 = arith.mulf %209, %210 : vector<1x256xf32>
    %212 = vector.broadcast %211 : vector<1x256xf32> to vector<8x256xf32>
    %213 = arith.mulf %203, %212 : vector<8x256xf32>
    %c0_76 = arith.constant 0 : index
    %c0_77 = arith.constant 0 : index
    %214 = vector.load %arg6[%c0_76, %c0_77] : memref<8x1xf32, #tpu.memory_space<vmem>>, vector<8x1xf32>
    %215 = vector.broadcast %214 : vector<8x1xf32> to vector<8x256xf32>
    %216 = arith.mulf %213, %215 : vector<8x256xf32>
    %c0_78 = arith.constant 0 : index
    %c0_79 = arith.constant 0 : index
    %c0_80 = arith.constant 0 : index
    %217 = vector.load %arg7[%c0_78, %c0_79, %c0_80] : memref<1x8x1xf32, #tpu.memory_space<vmem>>, vector<1x8x1xf32>
    %218 = vector.shape_cast %217 : vector<1x8x1xf32> to vector<8x1xf32>
    %cst_81 = arith.constant 1.000000e+00 : f32
    %219 = vector.broadcast %cst_81 : f32 to vector<8x1xf32>
    %220 = arith.addf %218, %219 : vector<8x1xf32>
    %221 = vector.broadcast %220 : vector<8x1xf32> to vector<8x256xf32>
    %222 = arith.mulf %216, %221 : vector<8x256xf32>
    %c0_82 = arith.constant 0 : index
    %c0_83 = arith.constant 0 : index
    %c0_84 = arith.constant 0 : index
    %223 = vector.load %arg8[%c0_82, %c0_83, %c0_84] : memref<1x8x1xf32, #tpu.memory_space<vmem>>, vector<1x8x1xf32>
    %224 = vector.shape_cast %223 : vector<1x8x1xf32> to vector<8x1xf32>
    %225 = vector.broadcast %224 : vector<8x1xf32> to vector<8x256xf32>
    %226 = arith.addf %222, %225 : vector<8x256xf32>
    %227 = arith.negf %226 : vector<8x256xf32>
    %228 = math.exp %227 : vector<8x256xf32>
    %cst_85 = arith.constant 1.000000e+00 : f32
    %229 = vector.broadcast %cst_85 : f32 to vector<8x256xf32>
    %230 = arith.addf %229, %228 : vector<8x256xf32>
    %231 = arith.divf %229, %230 : vector<8x256xf32>
    %232 = arith.mulf %226, %231 : vector<8x256xf32>
    %c0_86 = arith.constant 0 : index
    %c0_87 = arith.constant 0 : index
    %c0_88 = arith.constant 0 : index
    %233 = vector.load %arg9[%c0_86, %c0_87, %c0_88] : memref<1x8x256xf32, #tpu.memory_space<vmem>>, vector<1x8x256xf32>
    %234 = vector.shape_cast %233 : vector<1x8x256xf32> to vector<8x256xf32>
    %235 = vector.shape_cast %232 : vector<8x256xf32> to vector<1x8x256xf32>
    tpu.vector_store %arg9[%c0_86, %c0_87, %c0_88], %235 {strides = array<i32>} : memref<1x8x256xf32, #tpu.memory_space<vmem>>, vector<1x8x256xf32>,
    return
  }
  func.func @transform_0(%arg0: i32, %arg1: i32) -> (i32, i32, i32) {
    %c0_i32 = arith.constant 0 : i32
    %c0_i32_0 = arith.constant 0 : i32
    return %arg0, %c0_i32, %arg1 : i32, i32, i32
  }
  func.func @transform_1(%arg0: i32, %arg1: i32) -> (i32, i32) {
    %c0_i32 = arith.constant 0 : i32
    %c0_i32_0 = arith.constant 0 : i32
    %c0_i32_1 = arith.constant 0 : i32
    return %c0_i32, %c0_i32_0 : i32, i32
  }
  func.func @transform_2(%arg0: i32, %arg1: i32) -> (i32, i32, i32) {
    %c0_i32 = arith.constant 0 : i32
    %c0_i32_0 = arith.constant 0 : i32
    %c0_i32_1 = arith.constant 0 : i32
    %c0_i32_2 = arith.constant 0 : i32
    return %c0_i32, %c0_i32_0, %c0_i32_1 : i32, i32, i32
  }
  func.func @transform_3(%arg0: i32, %arg1: i32) -> (i32, i32) {
    %c0_i32 = arith.constant 0 : i32
    %c0_i32_0 = arith.constant 0 : i32
    %c0_i32_1 = arith.constant 0 : i32
    return %c0_i32, %c0_i32_0 : i32, i32
  }
  func.func @transform_4(%arg0: i32, %arg1: i32) -> (i32, i32) {
    %c0_i32 = arith.constant 0 : i32
    %c0_i32_0 = arith.constant 0 : i32
    %c0_i32_1 = arith.constant 0 : i32
    return %c0_i32, %c0_i32_0 : i32, i32
  }
  func.func @transform_5(%arg0: i32, %arg1: i32) -> (i32, i32, i32) {
    %c0_i32 = arith.constant 0 : i32
    %c0_i32_0 = arith.constant 0 : i32
    %c0_i32_1 = arith.constant 0 : i32
    return %arg0, %c0_i32, %c0_i32_0 : i32, i32, i32
  }
  func.func @transform_6(%arg0: i32, %arg1: i32) -> (i32, i32, i32) {
    %c0_i32 = arith.constant 0 : i32
    %c0_i32_0 = arith.constant 0 : i32
    %c0_i32_1 = arith.constant 0 : i32
    return %arg0, %c0_i32, %c0_i32_0 : i32, i32, i32
  }
  func.func @transform_7(%arg0: i32, %arg1: i32) -> (i32, i32, i32) {
    %c0_i32 = arith.constant 0 : i32
    %c0_i32_0 = arith.constant 0 : i32
    return %arg0, %c0_i32, %arg1 : i32, i32, i32
  }
}

</mosaic_0001>

<llo_original>
// kernel: tpu_custom_call.1
$region0: #{tpu_custom_call.1}
  #allocation0 [shape = 'u32[]', space=smem, size = 0x4, offset = 0x4, fixed_abs, tag = 'smem constant byte address 0x4 - core index']
  #allocation1 [shape = 'u32[144,128]{1,0:T(1,128)}', space=vmem, size = 0x12000, scoped, tag = 'internal scratch']
  %s0 = inlined_call_operand.vmem [shape: bf16[2,4,768], index: 0, kind: input, shape index: {}]
  %s1 = inlined_call_operand.vmem [shape: s32[2,256], index: 1, kind: input, shape index: {}]
  %s2 = inlined_call_operand.vmem [shape: bf16[9,8,4], index: 2, kind: input, shape index: {}]
  %s3 = inlined_call_operand.vmem [shape: f32[8,1], index: 3, kind: input, shape index: {}]
  %s4 = inlined_call_operand.vmem [shape: f32[8,1], index: 4, kind: input, shape index: {}]
  %s5 = inlined_call_operand.vmem [shape: f32[2,8,1], index: 5, kind: input, shape index: {}]
  %s6 = inlined_call_operand.vmem [shape: f32[2,8,1], index: 6, kind: input, shape index: {}]
  %s7 = inlined_call_operand.hbm [shape: f32[2,8,768], index: 7, kind: output, shape index: {}]
  %s8 = sld [smem:[#allocation0]]
  $region61: #{tpu_custom_call.1} parent=0
    _
  %s10 = ssub.s32 1, %s8
  %s11 = scalar_select 0, %s10, %s8
  $region1: #{tpu_custom_call.1} parent=0
    #allocation2 [shape = 'u8[16384]{0}', space=vmem, size = 0x4000, scoped, tag = 'output window, operand 0']
    #allocation3 [shape = 's32[2]{0}', space=sflag, size = 0x8, scoped, tag = 'scoped memory for tpu_custom_call.1']
    %12 = vsyncpa [#allocation3], 0
    %s13 = scalar_lea.sflag [#allocation3], 1
    %14 = vsyncpa %s13, 0
    loop: start=0, step=1, limit=8
    $region2: #{tpu_custom_call.1} parent=1 // loop_pre_header
      _
    $region3: #{tpu_custom_call.1} parent=1 // loop_header
      %s16 = sphi 0, %s20
      %p17 = scmp.ge.s32.totalorder %s16, 8
      %s23 = sphi 0, %s35
      %s24 = sphi 0, %s31
      %s25 = sphi 0, %s23
      %s26 = sphi 0, %s24
      %s27 = sphi 0, %s25
      %s28 = sphi 0, %s26
      %s40 = sphi 0, %s42
      %s43 = sphi 0, %s40
      %s44 = sphi 0, %s43
      %s60 = sphi 0, %s44
      %s64 = sphi 0, %s64
      %s66 = sphi 0, %s64
      %s67 = sphi 0, %s66
      %s81 = sphi 0, %s67
      %s85 = sphi 0, %s85
      %s87 = sphi 0, %s85
      %s88 = sphi 0, %s87
      %s102 = sphi 0, %s88
      %s106 = sphi 0, %s106
      %s108 = sphi 0, %s106
      %s109 = sphi 0, %s108
      %s123 = sphi 0, %s109
      %s127 = sphi 0, %s127
      %s129 = sphi 0, %s127
      %s130 = sphi 0, %s129
      %s144 = sphi 0, %s130
      %s150 = sphi 0, %s152
      %s153 = sphi 0, %s150
      %s154 = sphi 0, %s153
      %s170 = sphi 0, %s154
      %s176 = sphi 0, %s178
      %s179 = sphi 0, %s176
      %s180 = sphi 0, %s179
      %s196 = sphi 0, %s180
      %s204 = sphi 0, %s206
      %s207 = sphi 0, %s204
      %s208 = sphi 0, %s207
      %s224 = sphi 0, %s208
    $region4: #{tpu_custom_call.1} parent=1 // loop_header_branch
      %19 = sbr.rel (%p17) target = $region8
    $region5: #{tpu_custom_call.1} parent=1 // loop_body
      %s21 = ssub.s32 %s16, 1
      %s22 = ssub.s32 %s16, 2
      %s29 = sadd.s32 1, %s24
      %p30 = scmp.ge.s32.totalorder %s29, 3
      %s31 = scalar_select %p30, 0, %s29
      %s32 = sadd.s32 1, %s23
      %s33 = scalar_select %p30, %s32, %s23
      %p34 = scmp.ge.s32.totalorder %s33, 2
      %s35 = scalar_select %p34, 0, %s33
      %s36 = ssub.s32 %s23, %s35
      %s37 = ssub.s32 %s24, %s31
      %s38 = sor.u32 %s36, %s37
      %p39 = scmp.eq.s32.totalorder %s38, 0
      %s41 = sadd.s32 %s40, 1
      %s42 = scalar_select %p39, %s40, %s41
      %p45 = pneg %p39
      %p46 = scmp.eq.s32.totalorder %s16, 5
      %p47 = por %p45, %p46
      %p48 = scmp.ne.s32.totalorder %s40, %s43
      %p49 = scmp.eq.s32.totalorder %s16, 0
      %p50 = por %p48, %p49
      %p51 = scmp.ne.s32.totalorder %s40, %s43
      %p52 = scmp.eq.s32.totalorder %s21, 5
      %p53 = por %p51, %p52
      %p54 = scmp.ne.s32.totalorder %s43, %s44
      %p55 = scmp.eq.s32.totalorder %s21, 0
      %p56 = por %p54, %p55
      %p57 = scmp.ne.s32.totalorder %s43, %s44
      %p58 = scmp.eq.s32.totalorder %s22, 5
      %p59 = por %p57, %p58
      %p61 = scmp.ne.s32.totalorder %s44, %s60
      %p62 = scmp.eq.s32.totalorder %s22, 0
      %p63 = por %p61, %p62
      %s65 = sadd.s32 %s64, 1
      %p68 = scmp.eq.s32.totalorder %s16, 5
      %p69 = scmp.ne.s32.totalorder %s64, %s66
      %p70 = scmp.eq.s32.totalorder %s16, 0
      %p71 = por %p69, %p70
      %p72 = scmp.ne.s32.totalorder %s64, %s66
      %p73 = scmp.eq.s32.totalorder %s21, 5
      %p74 = por %p72, %p73
      %p75 = scmp.ne.s32.totalorder %s66, %s67
      %p76 = scmp.eq.s32.totalorder %s21, 0
      %p77 = por %p75, %p76
      %p78 = scmp.ne.s32.totalorder %s66, %s67
      %p79 = scmp.eq.s32.totalorder %s22, 5
      %p80 = por %p78, %p79
      %p82 = scmp.ne.s32.totalorder %s67, %s81
      %p83 = scmp.eq.s32.totalorder %s22, 0
      %p84 = por %p82, %p83
      %s86 = sadd.s32 %s85, 1
      %p89 = scmp.eq.s32.totalorder %s16, 5
      %p90 = scmp.ne.s32.totalorder %s85, %s87
      %p91 = scmp.eq.s32.totalorder %s16, 0
      %p92 = por %p90, %p91
      %p93 = scmp.ne.s32.totalorder %s85, %s87
      %p94 = scmp.eq.s32.totalorder %s21, 5
      %p95 = por %p93, %p94
      %p96 = scmp.ne.s32.totalorder %s87, %s88
      %p97 = scmp.eq.s32.totalorder %s21, 0
      %p98 = por %p96, %p97
      %p99 = scmp.ne.s32.totalorder %s87, %s88
      %p100 = scmp.eq.s32.totalorder %s22, 5
      %p101 = por %p99, %p100
      %p103 = scmp.ne.s32.totalorder %s88, %s102
      %p104 = scmp.eq.s32.totalorder %s22, 0
      %p105 = por %p103, %p104
      %s107 = sadd.s32 %s106, 1
      %p110 = scmp.eq.s32.totalorder %s16, 5
      %p111 = scmp.ne.s32.totalorder %s106, %s108
      %p112 = scmp.eq.s32.totalorder %s16, 0
      %p113 = por %p111, %p112
      %p114 = scmp.ne.s32.totalorder %s106, %s108
      %p115 = scmp.eq.s32.totalorder %s21, 5
      %p116 = por %p114, %p115
      %p117 = scmp.ne.s32.totalorder %s108, %s109
      %p118 = scmp.eq.s32.totalorder %s21, 0
      %p119 = por %p117, %p118
      %p120 = scmp.ne.s32.totalorder %s108, %s109
      %p121 = scmp.eq.s32.totalorder %s22, 5
      %p122 = por %p120, %p121
      %p124 = scmp.ne.s32.totalorder %s109, %s123
      %p125 = scmp.eq.s32.totalorder %s22, 0
      %p126 = por %p124, %p125
      %s128 = sadd.s32 %s127, 1
      %p131 = scmp.eq.s32.totalorder %s16, 5
      %p132 = scmp.ne.s32.totalorder %s127, %s129
      %p133 = scmp.eq.s32.totalorder %s16, 0
      %p134 = por %p132, %p133
      %p135 = scmp.ne.s32.totalorder %s127, %s129
      %p136 = scmp.eq.s32.totalorder %s21, 5
      %p137 = por %p135, %p136
      %p138 = scmp.ne.s32.totalorder %s129, %s130
      %p139 = scmp.eq.s32.totalorder %s21, 0
      %p140 = por %p138, %p139
      %p141 = scmp.ne.s32.totalorder %s129, %s130
      %p142 = scmp.eq.s32.totalorder %s22, 5
      %p143 = por %p141, %p142
      %p145 = scmp.ne.s32.totalorder %s130, %s144
      %p146 = scmp.eq.s32.totalorder %s22, 0
      %p147 = por %p145, %p146
      %s148 = ssub.s32 %s23, %s35
      %p149 = scmp.eq.s32.totalorder %s148, 0
      %s151 = sadd.s32 %s150, 1
      %s152 = scalar_select %p149, %s150, %s151
      %p155 = pneg %p149
      %p156 = scmp.eq.s32.totalorder %s16, 5
      %p157 = por %p155, %p156
      %p158 = scmp.ne.s32.totalorder %s150, %s153
      %p159 = scmp.eq.s32.totalorder %s16, 0
      %p160 = por %p158, %p159
      %p161 = scmp.ne.s32.totalorder %s150, %s153
      %p162 = scmp.eq.s32.totalorder %s21, 5
      %p163 = por %p161, %p162
      %p164 = scmp.ne.s32.totalorder %s153, %s154
      %p165 = scmp.eq.s32.totalorder %s21, 0
      %p166 = por %p164, %p165
      %p167 = scmp.ne.s32.totalorder %s153, %s154
      %p168 = scmp.eq.s32.totalorder %s22, 5
      %p169 = por %p167, %p168
      %p171 = scmp.ne.s32.totalorder %s154, %s170
      %p172 = scmp.eq.s32.totalorder %s22, 0
      %p173 = por %p171, %p172
      %s174 = ssub.s32 %s23, %s35
      %p175 = scmp.eq.s32.totalorder %s174, 0
      %s177 = sadd.s32 %s176, 1
      %s178 = scalar_select %p175, %s176, %s177
      %p181 = pneg %p175
      %p182 = scmp.eq.s32.totalorder %s16, 5
      %p183 = por %p181, %p182
      %p184 = scmp.ne.s32.totalorder %s176, %s179
      %p185 = scmp.eq.s32.totalorder %s16, 0
      %p186 = por %p184, %p185
      %p187 = scmp.ne.s32.totalorder %s176, %s179
      %p188 = scmp.eq.s32.totalorder %s21, 5
      %p189 = por %p187, %p188
      %p190 = scmp.ne.s32.totalorder %s179, %s180
      %p191 = scmp.eq.s32.totalorder %s21, 0
      %p192 = por %p190, %p191
      %p193 = scmp.ne.s32.totalorder %s179, %s180
      %p194 = scmp.eq.s32.totalorder %s22, 5
      %p195 = por %p193, %p194
      %p197 = scmp.ne.s32.totalorder %s180, %s196
      %p198 = scmp.eq.s32.totalorder %s22, 0
      %p199 = por %p197, %p198
      %s200 = ssub.s32 %s23, %s35
      %s201 = ssub.s32 %s24, %s31
      %s202 = sor.u32 %s200, %s201
      %p203 = scmp.eq.s32.totalorder %s202, 0
      %s205 = sadd.s32 %s204, 1
      %s206 = scalar_select %p203, %s204, %s205
      %p209 = pneg %p203
      %p210 = scmp.eq.s32.totalorder %s16, 5
      %p211 = por %p209, %p210
      %p212 = scmp.ne.s32.totalorder %s204, %s207
      %p213 = scmp.eq.s32.totalorder %s16, 0
      %p214 = por %p212, %p213
      %p215 = scmp.ne.s32.totalorder %s204, %s207
      %p216 = scmp.eq.s32.totalorder %s21, 5
      %p217 = por %p215, %p216
      %p218 = scmp.ne.s32.totalorder %s207, %s208
      %p219 = scmp.eq.s32.totalorder %s21, 0
      %p220 = por %p218, %p219
      %p221 = scmp.ne.s32.totalorder %s207, %s208
      %p222 = scmp.eq.s32.totalorder %s22, 5
      %p223 = por %p221, %p222
      %p225 = scmp.ne.s32.totalorder %s208, %s224
      %p226 = scmp.eq.s32.totalorder %s22, 0
      %p227 = por %p225, %p226
      %p228 = scmp.le.s32.totalorder 1, %s16
      %p229 = scmp.lt.s32.totalorder %s16, 7
      %p230 = pnand %p228, %p229
      %p231 = pneg %p230
      // Predicated region
      $region9: #{tpu_custom_call.1} parent=5 // pred_check
        _
      $region10: #{tpu_custom_call.1} parent=5 // pred_check_branch
        %233 = sbr.rel (%p230) target = $region12
      $region11: #{tpu_custom_call.1} parent=5 // pred_region
        %s234 = ssub.s32 %s16, 1
        // Predicated region
        $region13: #{tpu_custom_call.1} parent=11 // pred_check
          %p235 = pneg %p77
        $region14: #{tpu_custom_call.1} parent=11 // pred_check_branch
          %237 = sbr.rel (%p235) target = $region16
        $region15: #{tpu_custom_call.1} parent=11 // pred_region
          _
        $region16: #{tpu_custom_call.1} parent=11 // pred_fallthru
          _
        // Predicated region
        $region17: #{tpu_custom_call.1} parent=11 // pred_check
          %p238 = pneg %p98
        $region18: #{tpu_custom_call.1} parent=11 // pred_check_branch
          %240 = sbr.rel (%p238) target = $region20
        $region19: #{tpu_custom_call.1} parent=11 // pred_region
          _
        $region20: #{tpu_custom_call.1} parent=11 // pred_fallthru
          _
        // Predicated region
        $region21: #{tpu_custom_call.1} parent=11 // pred_check
          %p241 = pneg %p119
        $region22: #{tpu_custom_call.1} parent=11 // pred_check_branch
          %243 = sbr.rel (%p241) target = $region24
        $region23: #{tpu_custom_call.1} parent=11 // pred_region
          _
        $region24: #{tpu_custom_call.1} parent=11 // pred_fallthru
          _
        // Predicated region
        $region25: #{tpu_custom_call.1} parent=11 // pred_check
          %p244 = pneg %p140
        $region26: #{tpu_custom_call.1} parent=11 // pred_check_branch
          %246 = sbr.rel (%p244) target = $region28
        $region27: #{tpu_custom_call.1} parent=11 // pred_region
          _
        $region28: #{tpu_custom_call.1} parent=11 // pred_fallthru
          _
      $region12: #{tpu_custom_call.1} parent=5 // pred_fallthru
        _
      %p247 = scmp.lt.s32.totalorder %s16, 6
      // Predicated region
      $region29: #{tpu_custom_call.1} parent=5 // pred_check
        %p248 = pneg %p247
      $region30: #{tpu_custom_call.1} parent=5 // pred_check_branch
        %250 = sbr.rel (%p248) target = $region32
      $region31: #{tpu_custom_call.1} parent=5 // pred_region
        // Predicated region
        $region33: #{tpu_custom_call.1} parent=31 // pred_check
          %p251 = pneg %p50
        $region34: #{tpu_custom_call.1} parent=31 // pred_check_branch
          %253 = sbr.rel (%p251) target = $region36
        $region35: #{tpu_custom_call.1} parent=31 // pred_region
          %s254 = smul.u32 2, %s24
          %p255 = scmp.lt.s32.totalorder %s23, 1
          %s256 = scalar_select %p255, %s23, 1
          %p257 = scmp.lt.s32.totalorder %s254, 5
          %s258 = scalar_select %p257, %s254, 5
          %s259 = smul.addr %s256, 6
          %s260 = sadd.s32 %s258, %s259
          %s261 = smul.addr %s260, 2
          %s262 = scalar_lea.vmem %s0, %s261
          %s263 = smul.u32 2, %s24
        $region36: #{tpu_custom_call.1} parent=31 // pred_fallthru
          _
        // Predicated region
        $region37: #{tpu_custom_call.1} parent=31 // pred_check
          %p264 = pneg %p160
        $region38: #{tpu_custom_call.1} parent=31 // pred_check_branch
          %266 = sbr.rel (%p264) target = $region40
        $region39: #{tpu_custom_call.1} parent=31 // pred_region
          %p267 = scmp.lt.s32.totalorder %s23, 1
          %s268 = scalar_select %p267, %s23, 1
          %s269 = smul.addr %s268, 8
          %s270 = scalar_lea.vmem %s5, %s269
        $region40: #{tpu_custom_call.1} parent=31 // pred_fallthru
          _
        // Predicated region
        $region41: #{tpu_custom_call.1} parent=31 // pred_check
          %p271 = pneg %p186
        $region42: #{tpu_custom_call.1} parent=31 // pred_check_branch
          %273 = sbr.rel (%p271) target = $region44
        $region43: #{tpu_custom_call.1} parent=31 // pred_region
          %p274 = scmp.lt.s32.totalorder %s23, 1
          %s275 = scalar_select %p274, %s23, 1
          %s276 = smul.addr %s275, 8
          %s277 = scalar_lea.vmem %s6, %s276
        $region44: #{tpu_custom_call.1} parent=31 // pred_fallthru
          _
      $region32: #{tpu_custom_call.1} parent=5 // pred_fallthru
        _
      %p278 = scmp.le.s32.totalorder 1, %s16
      %p279 = scmp.lt.s32.totalorder %s16, 7
      %p280 = pnand %p278, %p279
      %p281 = pneg %p280
      // Predicated region
      $region45: #{tpu_custom_call.1} parent=5 // pred_check
        _
      $region46: #{tpu_custom_call.1} parent=5 // pred_check_branch
        %283 = sbr.rel (%p280) target = $region48
      $region47: #{tpu_custom_call.1} parent=5 // pred_region
        %s284 = ssub.s32 %s16, 1
        %s285 = smul.u32 2, %s26
        %p286 = scmp.lt.s32.totalorder %s25, 1
        %s287 = scalar_select %p286, %s25, 1
        %p288 = scmp.lt.s32.totalorder %s285, 5
        %s289 = scalar_select %p288, %s285, 5
        %s290 = smul.addr %s287, 6
        %s291 = sadd.s32 %s289, %s290
        %s292 = smul.addr %s291, 2
        %s293 = scalar_lea.vmem %s0, %s292
        %p294 = pneg %p56
        %p295 = pneg %p53
        %p296 = pneg %p77
        %p297 = pneg %p74
        %p298 = pneg %p98
        %p299 = pneg %p95
        %p300 = pneg %p119
        %p301 = pneg %p116
        %p302 = pneg %p140
        %p303 = pneg %p137
        %p304 = scmp.lt.s32.totalorder %s25, 1
        %s305 = scalar_select %p304, %s25, 1
        %s306 = smul.addr %s305, 8
        %s307 = scalar_lea.vmem %s5, %s306
        %p308 = pneg %p166
        %p309 = pneg %p163
        %p310 = scmp.lt.s32.totalorder %s25, 1
        %s311 = scalar_select %p310, %s25, 1
        %s312 = smul.addr %s311, 8
        %s313 = scalar_lea.vmem %s6, %s312
        %p314 = pneg %p192
        %p315 = pneg %p189
        %p316 = pneg %p220
        %p317 = pneg %p217
        %s318 = sand.u32 %s207, 1
        %s319 = scalar_lea.sflag [#allocation3], %s318
        %s320 = sand.u32 %s207, 1
        %s321 = smul.addr %s320, 16
        %s322 = scalar_lea.vmem [#allocation2], %s321
        %s323 = smul.u32 2, %s26
        %p324 = scmp.lt.s32.totalorder %s25, 1
        %s325 = scalar_select %p324, %s25, 1
        %p326 = scmp.lt.s32.totalorder %s323, 5
        %s327 = scalar_select %p326, %s323, 5
        %s328 = smul.addr %s325, 6
        %s329 = sadd.s32 %s327, %s328
        %s330 = smul.addr %s329, 2
        %s331 = scalar_lea.vmem %s0, %s330
        %s332 = smul.u32 2, %s26
        %p333 = scmp.lt.s32.totalorder %s25, 1
        %s334 = scalar_select %p333, %s25, 1
        %s335 = smul.addr %s334, 8
        %s336 = scalar_lea.vmem %s5, %s335
        %p337 = scmp.lt.s32.totalorder %s25, 1
        %s338 = scalar_select %p337, %s25, 1
        %s339 = smul.addr %s338, 8
        %s340 = scalar_lea.vmem %s6, %s339
        %s341 = smul.u32 2, %s26
        %v343 = vld [vmem:[%s331] sm:$0xf]
        %v344 = vld [vmem:[%s1] sm:$0xf]
        %v347 = vunpack.c.l.s4 1983009808
        %v348 = vunpack.c.0.s8 %v347
        %v349 = vlaneseq
        %v350 = vshrl.u32 %v349, 7
        %v351 = vsub.s32 %v348, %v350
        %v352 = vrot.slane %v343, %v351
        %v353 = vcombine.high %v352, %v352
        %354 = vrot.lane.b32.xlu0 %v353, 17
        %v355 = vpop.permute.xlu0 %354
        %356 = vrot.lane.b32.xlu0 %v352, 17
        %v357 = vpop.permute.xlu0 %356
        %vm358 = vcmask 138240
        %v359 = vsel %vm358, %v357, %v355
        %vm360 = vcmask 138240
        %v363 = vsel %vm360, %v355, %v357
        %v364 = vld [vmem:[%s2] sm:$0xf]
        %vm365 = vcmask 31744
        %v367 = vsel %vm365, %v364, 0
        %vm369 = vcmask 1041408
        %v370 = vsel %vm369, %v363, 0
        %v373 = vsel %vm369, %v359, 0
        %375 = vmatprep.subr.bf16.mxu0 %v373
        %376 = vmatpush1.bf16.msra.mxu0 %v370
        %377 = vmatprep.subr.bf16.mxu0 0
        %378 = vmatpush1.bf16.msra.mxu0 0
        %379 = vmatprep.subr.bf16.mxu0 0
        %380 = vmatpush1.bf16.msra.mxu0 0
        %381 = vmatprep.subr.bf16.mxu0 0
        %382 = vmatpush1.bf16.msra.mxu0 0
        %383 = vmatprep.subr.bf16.mxu0 0
        %384 = vmatpush1.bf16.msra.mxu0 0
        %385 = vmatprep.subr.bf16.mxu0 0
        %386 = vmatpush1.bf16.msra.mxu0 0
        %387 = vmatprep.subr.bf16.mxu0 0
        %388 = vmatpush1.bf16.msra.mxu0 0
        %389 = vmatprep.subr.bf16.mxu0 0
        %390 = vmatpush1.bf16.msra.mxu0 0
        %391 = vmatprep.subr.bf16.mxu0 0
        %392 = vmatpush1.bf16.msra.mxu0 0
        %393 = vmatprep.subr.bf16.mxu0 0
        %394 = vmatpush1.bf16.msra.mxu0 0
        %395 = vmatprep.subr.bf16.mxu0 0
        %396 = vmatpush1.bf16.msra.mxu0 0
        %397 = vmatprep.subr.bf16.mxu0 0
        %398 = vmatpush1.bf16.msra.mxu0 0
        %399 = vmatprep.subr.bf16.mxu0 0
        %400 = vmatpush1.bf16.msra.mxu0 0
        %401 = vmatprep.subr.bf16.mxu0 0
        %402 = vmatpush1.bf16.msra.mxu0 0
        %403 = vmatprep.subr.bf16.mxu0 0
        %404 = vmatpush1.bf16.msra.mxu0 0
        %405 = vmatprep.subr.bf16.mxu0 0
        %406 = vmatpush1.bf16.msra.mxu0 0
        %407 = vmatprep.mubr.bf16.mxu0 0
        %408 = vmatmul.mubr.bf16.gmra.mrb[0].mxu0 %v367
        %v409 = vpop.f32.mrb[0].mxu0
        %v410 = vadd.f32 0.0, %v409
        %v411 = vpop.f32.mrb[0].mxu0
        %v412 = vadd.f32 0.0, %v411
        %v413 = vpop.f32.mrb[0].mxu0
        %v414 = vpop.f32.mrb[0].mxu0
        %415 = vdwg.mxu0
        %vm416 = vcmp.ge.s32.totalorder %v344, 1
        %vm417 = vcmp.lt.s32.totalorder %v344, 17
        %vm418 = vmand %vm416, %vm417
        %v419 = vsel %vm416, 1, 0
        %v420 = vrot.slane %v419, 7
        %v421 = vrot.slane %v420, 2
        %vm422 = vcmp.ne.s32.totalorder %v421, 0
        %vm423 = vmand %vm418, %vm422
        %v424 = vsel %vm417, 1, 0
        %v425 = vrot.slane %v424, 7
        %v426 = vrot.slane %v425, 2
        %vm427 = vcmp.ne.s32.totalorder %v426, 0
        %vm428 = vmand %vm423, %vm427
        %v429 = vsel %vm428, 1, 0
        %v430 = vlaneseq
        %v431 = vshrl.u32 %v430, 7
        %v432 = vsub.s32 0, %v431
        %v433 = vrot.slane %v429, %v432
        %v434 = vlaneseq
        %v435 = vshrl.u32 %v434, 7
        %v436 = vsub.s32 2, %v435
        %v437 = vrot.slane %v429, %v436
        %v438 = vlaneseq
        %v439 = vshrl.u32 %v438, 7
        %v440 = vsub.s32 0, %v439
        %v441 = vrot.slane %v433, %v440
        %v442 = vlaneseq
        %v443 = vshrl.u32 %v442, 7
        %v444 = vsub.s32 0, %v443
        %v445 = vrot.slane %v437, %v444
        %vm446 = vcmp.eq.s32.totalorder %v441, 1
        %vm447 = vcmp.eq.s32.totalorder %v445, 1
        %v448 = vsel %vm446, %v410, 0.0
        %v449 = vsel %vm447, %v412, 0.0
        %v450 = vadd.f32 %v448, 0.0
        %v451 = vadd.f32 %v449, 0.0
        %452 = vrot.lane.b32.xlu0 %v353, 16
        %v453 = vpop.permute.xlu0 %452
        %454 = vrot.lane.b32.xlu0 %v352, 16
        %v455 = vpop.permute.xlu0 %454
        %vm456 = vcmask 130048
        %v457 = vsel %vm456, %v455, %v453
        %vm458 = vcmask 130048
        %v461 = vsel %vm458, %v453, %v455
        %s462 = scalar_lea.vmem %s2, 4
        %v463 = vld [vmem:[%s462] sm:$0xf]
        %v465 = vsel %vm365, %v463, 0
        %v467 = vsel %vm369, %v461, 0
        %v470 = vsel %vm369, %v457, 0
        %472 = vmatprep.subr.bf16.mxu0 %v470
        %473 = vmatpush1.bf16.msra.mxu0 %v467
        %474 = vmatprep.subr.bf16.mxu0 0
        %475 = vmatpush1.bf16.msra.mxu0 0
        %476 = vmatprep.subr.bf16.mxu0 0
        %477 = vmatpush1.bf16.msra.mxu0 0
        %478 = vmatprep.subr.bf16.mxu0 0
        %479 = vmatpush1.bf16.msra.mxu0 0
        %480 = vmatprep.subr.bf16.mxu0 0
        %481 = vmatpush1.bf16.msra.mxu0 0
        %482 = vmatprep.subr.bf16.mxu0 0
        %483 = vmatpush1.bf16.msra.mxu0 0
        %484 = vmatprep.subr.bf16.mxu0 0
        %485 = vmatpush1.bf16.msra.mxu0 0
        %486 = vmatprep.subr.bf16.mxu0 0
        %487 = vmatpush1.bf16.msra.mxu0 0
        %488 = vmatprep.subr.bf16.mxu0 0
        %489 = vmatpush1.bf16.msra.mxu0 0
        %490 = vmatprep.subr.bf16.mxu0 0
        %491 = vmatpush1.bf16.msra.mxu0 0
        %492 = vmatprep.subr.bf16.mxu0 0
        %493 = vmatpush1.bf16.msra.mxu0 0
        %494 = vmatprep.subr.bf16.mxu0 0
        %495 = vmatpush1.bf16.msra.mxu0 0
        %496 = vmatprep.subr.bf16.mxu0 0
        %497 = vmatpush1.bf16.msra.mxu0 0
        %498 = vmatprep.subr.bf16.mxu0 0
        %499 = vmatpush1.bf16.msra.mxu0 0
        %500 = vmatprep.subr.bf16.mxu0 0
        %501 = vmatpush1.bf16.msra.mxu0 0
        %502 = vmatprep.subr.bf16.mxu0 0
        %503 = vmatpush1.bf16.msra.mxu0 0
        %504 = vmatprep.mubr.bf16.mxu0 0
        %505 = vmatmul.mubr.bf16.gmra.mrb[0].mxu0 %v465
        %v506 = vpop.f32.mrb[0].mxu0
        %v507 = vadd.f32 0.0, %v506
        %v508 = vpop.f32.mrb[0].mxu0
        %v509 = vadd.f32 0.0, %v508
        %v510 = vpop.f32.mrb[0].mxu0
        %v511 = vpop.f32.mrb[0].mxu0
        %512 = vdwg.mxu0
        %vm513 = vcmp.ge.s32.totalorder %v344, 0
        %v514 = vsel %vm513, 1, 0
        %v515 = vrot.slane %v514, 7
        %v516 = vrot.slane %v515, 2
        %vm517 = vcmp.ne.s32.totalorder %v516, 0
        %vm518 = vmand %vm418, %vm517
        %vm519 = vcmp.lt.s32.totalorder %v344, 16
        %v520 = vsel %vm519, 1, 0
        %v521 = vrot.slane %v520, 7
        %v522 = vrot.slane %v521, 2
        %vm523 = vcmp.ne.s32.totalorder %v522, 0
        %vm524 = vmand %vm518, %vm523
        %v525 = vsel %vm524, 1, 0
        %v526 = vlaneseq
        %v527 = vshrl.u32 %v526, 7
        %v528 = vsub.s32 0, %v527
        %v529 = vrot.slane %v525, %v528
        %v530 = vlaneseq
        %v531 = vshrl.u32 %v530, 7
        %v532 = vsub.s32 2, %v531
        %v533 = vrot.slane %v525, %v532
        %v534 = vlaneseq
        %v535 = vshrl.u32 %v534, 7
        %v536 = vsub.s32 0, %v535
        %v537 = vrot.slane %v529, %v536
        %v538 = vlaneseq
        %v539 = vshrl.u32 %v538, 7
        %v540 = vsub.s32 0, %v539
        %v541 = vrot.slane %v533, %v540
        %vm542 = vcmp.eq.s32.totalorder %v537, 1
        %vm543 = vcmp.eq.s32.totalorder %v541, 1
        %v544 = vsel %vm542, %v507, 0.0
        %v545 = vsel %vm543, %v509, 0.0
        %v546 = vadd.f32 %v450, %v544
        %v547 = vadd.f32 %v451, %v545
        %548 = vrot.lane.b32.xlu0 %v353, 15
        %v549 = vpop.permute.xlu0 %548
        %550 = vrot.lane.b32.xlu0 %v352, 15
        %v551 = vpop.permute.xlu0 %550
        %vm552 = vcmask 121856
        %v553 = vsel %vm552, %v551, %v549
        %vm554 = vcmask 121856
        %v557 = vsel %vm554, %v549, %v551
        %s558 = scalar_lea.vmem %s2, 8
        %v559 = vld [vmem:[%s558] sm:$0xf]
        %v561 = vsel %vm365, %v559, 0
        %v563 = vsel %vm369, %v557, 0
        %v566 = vsel %vm369, %v553, 0
        %568 = vmatprep.subr.bf16.mxu0 %v566
        %569 = vmatpush1.bf16.msra.mxu0 %v563
        %570 = vmatprep.subr.bf16.mxu0 0
        %571 = vmatpush1.bf16.msra.mxu0 0
        %572 = vmatprep.subr.bf16.mxu0 0
        %573 = vmatpush1.bf16.msra.mxu0 0
        %574 = vmatprep.subr.bf16.mxu0 0
        %575 = vmatpush1.bf16.msra.mxu0 0
        %576 = vmatprep.subr.bf16.mxu0 0
        %577 = vmatpush1.bf16.msra.mxu0 0
        %578 = vmatprep.subr.bf16.mxu0 0
        %579 = vmatpush1.bf16.msra.mxu0 0
        %580 = vmatprep.subr.bf16.mxu0 0
        %581 = vmatpush1.bf16.msra.mxu0 0
        %582 = vmatprep.subr.bf16.mxu0 0
        %583 = vmatpush1.bf16.msra.mxu0 0
        %584 = vmatprep.subr.bf16.mxu0 0
        %585 = vmatpush1.bf16.msra.mxu0 0
        %586 = vmatprep.subr.bf16.mxu0 0
        %587 = vmatpush1.bf16.msra.mxu0 0
        %588 = vmatprep.subr.bf16.mxu0 0
        %589 = vmatpush1.bf16.msra.mxu0 0
        %590 = vmatprep.subr.bf16.mxu0 0
        %591 = vmatpush1.bf16.msra.mxu0 0
        %592 = vmatprep.subr.bf16.mxu0 0
        %593 = vmatpush1.bf16.msra.mxu0 0
        %594 = vmatprep.subr.bf16.mxu0 0
        %595 = vmatpush1.bf16.msra.mxu0 0
        %596 = vmatprep.subr.bf16.mxu0 0
        %597 = vmatpush1.bf16.msra.mxu0 0
        %598 = vmatprep.subr.bf16.mxu0 0
        %599 = vmatpush1.bf16.msra.mxu0 0
        %600 = vmatprep.mubr.bf16.mxu0 0
        %601 = vmatmul.mubr.bf16.gmra.mrb[0].mxu0 %v561
        %v602 = vpop.f32.mrb[0].mxu0
        %v603 = vadd.f32 0.0, %v602
        %v604 = vpop.f32.mrb[0].mxu0
        %v605 = vadd.f32 0.0, %v604
        %v606 = vpop.f32.mrb[0].mxu0
        %v607 = vpop.f32.mrb[0].mxu0
        %608 = vdwg.mxu0
        %vm609 = vcmp.ge.s32.totalorder %v344, 4294967295
        %v610 = vsel %vm609, 1, 0
        %v611 = vrot.slane %v610, 7
        %v612 = vrot.slane %v611, 2
        %vm613 = vcmp.ne.s32.totalorder %v612, 0
        %vm614 = vmand %vm418, %vm613
        %vm615 = vcmp.lt.s32.totalorder %v344, 15
        %v616 = vsel %vm615, 1, 0
        %v617 = vrot.slane %v616, 7
        %v618 = vrot.slane %v617, 2
        %vm619 = vcmp.ne.s32.totalorder %v618, 0
        %vm620 = vmand %vm614, %vm619
        %v621 = vsel %vm620, 1, 0
        %v622 = vlaneseq
        %v623 = vshrl.u32 %v622, 7
        %v624 = vsub.s32 0, %v623
        %v625 = vrot.slane %v621, %v624
        %v626 = vlaneseq
        %v627 = vshrl.u32 %v626, 7
        %v628 = vsub.s32 2, %v627
        %v629 = vrot.slane %v621, %v628
        %v630 = vlaneseq
        %v631 = vshrl.u32 %v630, 7
        %v632 = vsub.s32 0, %v631
        %v633 = vrot.slane %v625, %v632
        %v634 = vlaneseq
        %v635 = vshrl.u32 %v634, 7
        %v636 = vsub.s32 0, %v635
        %v637 = vrot.slane %v629, %v636
        %vm638 = vcmp.eq.s32.totalorder %v633, 1
        %vm639 = vcmp.eq.s32.totalorder %v637, 1
        %v640 = vsel %vm638, %v603, 0.0
        %v641 = vsel %vm639, %v605, 0.0
        %v642 = vadd.f32 %v546, %v640
        %v643 = vadd.f32 %v547, %v641
        %644 = vrot.lane.b32.xlu0 %v353, 1
        %v645 = vpop.permute.xlu0 %644
        %646 = vrot.lane.b32.xlu0 %v352, 1
        %v647 = vpop.permute.xlu0 %646
        %vm648 = vcmask 7168
        %v649 = vsel %vm648, %v647, %v645
        %vm650 = vcmask 7168
        %v653 = vsel %vm650, %v645, %v647
        %s654 = scalar_lea.vmem %s2, 12
        %v655 = vld [vmem:[%s654] sm:$0xf]
        %v657 = vsel %vm365, %v655, 0
        %v659 = vsel %vm369, %v653, 0
        %v662 = vsel %vm369, %v649, 0
        %664 = vmatprep.subr.bf16.mxu0 %v662
        %665 = vmatpush1.bf16.msra.mxu0 %v659
        %666 = vmatprep.subr.bf16.mxu0 0
        %667 = vmatpush1.bf16.msra.mxu0 0
        %668 = vmatprep.subr.bf16.mxu0 0
        %669 = vmatpush1.bf16.msra.mxu0 0
        %670 = vmatprep.subr.bf16.mxu0 0
        %671 = vmatpush1.bf16.msra.mxu0 0
        %672 = vmatprep.subr.bf16.mxu0 0
        %673 = vmatpush1.bf16.msra.mxu0 0
        %674 = vmatprep.subr.bf16.mxu0 0
        %675 = vmatpush1.bf16.msra.mxu0 0
        %676 = vmatprep.subr.bf16.mxu0 0
        %677 = vmatpush1.bf16.msra.mxu0 0
        %678 = vmatprep.subr.bf16.mxu0 0
        %679 = vmatpush1.bf16.msra.mxu0 0
        %680 = vmatprep.subr.bf16.mxu0 0
        %681 = vmatpush1.bf16.msra.mxu0 0
        %682 = vmatprep.subr.bf16.mxu0 0
        %683 = vmatpush1.bf16.msra.mxu0 0
        %684 = vmatprep.subr.bf16.mxu0 0
        %685 = vmatpush1.bf16.msra.mxu0 0
        %686 = vmatprep.subr.bf16.mxu0 0
        %687 = vmatpush1.bf16.msra.mxu0 0
        %688 = vmatprep.subr.bf16.mxu0 0
        %689 = vmatpush1.bf16.msra.mxu0 0
        %690 = vmatprep.subr.bf16.mxu0 0
        %691 = vmatpush1.bf16.msra.mxu0 0
        %692 = vmatprep.subr.bf16.mxu0 0
        %693 = vmatpush1.bf16.msra.mxu0 0
        %694 = vmatprep.subr.bf16.mxu0 0
        %695 = vmatpush1.bf16.msra.mxu0 0
        %696 = vmatprep.mubr.bf16.mxu0 0
        %697 = vmatmul.mubr.bf16.gmra.mrb[0].mxu0 %v657
        %v698 = vpop.f32.mrb[0].mxu0
        %v699 = vadd.f32 0.0, %v698
        %v700 = vpop.f32.mrb[0].mxu0
        %v701 = vadd.f32 0.0, %v700
        %v702 = vpop.f32.mrb[0].mxu0
        %v703 = vpop.f32.mrb[0].mxu0
        %704 = vdwg.mxu0
        %vm705 = vmand %vm513, %vm519
        %vm706 = vmand %vm705, %vm422
        %vm707 = vmand %vm706, %vm427
        %v708 = vsel %vm707, 1, 0
        %v709 = vlaneseq
        %v710 = vshrl.u32 %v709, 7
        %v711 = vsub.s32 0, %v710
        %v712 = vrot.slane %v708, %v711
        %v713 = vlaneseq
        %v714 = vshrl.u32 %v713, 7
        %v715 = vsub.s32 2, %v714
        %v716 = vrot.slane %v708, %v715
        %v717 = vlaneseq
        %v718 = vshrl.u32 %v717, 7
        %v719 = vsub.s32 0, %v718
        %v720 = vrot.slane %v712, %v719
        %v721 = vlaneseq
        %v722 = vshrl.u32 %v721, 7
        %v723 = vsub.s32 0, %v722
        %v724 = vrot.slane %v716, %v723
        %vm725 = vcmp.eq.s32.totalorder %v720, 1
        %vm726 = vcmp.eq.s32.totalorder %v724, 1
        %v727 = vsel %vm725, %v699, 0.0
        %v728 = vsel %vm726, %v701, 0.0
        %v729 = vadd.f32 %v642, %v727
        %v730 = vadd.f32 %v643, %v728
        %s731 = scalar_lea.vmem %s2, 16
        %v732 = vld [vmem:[%s731] sm:$0xf]
        %v734 = vsel %vm365, %v732, 0
        %v737 = vsel %vm369, %v352, 0
        %v740 = vsel %vm369, %v353, 0
        %742 = vmatprep.subr.bf16.mxu0 %v740
        %743 = vmatpush1.bf16.msra.mxu0 %v737
        %744 = vmatprep.subr.bf16.mxu0 0
        %745 = vmatpush1.bf16.msra.mxu0 0
        %746 = vmatprep.subr.bf16.mxu0 0
        %747 = vmatpush1.bf16.msra.mxu0 0
        %748 = vmatprep.subr.bf16.mxu0 0
        %749 = vmatpush1.bf16.msra.mxu0 0
        %750 = vmatprep.subr.bf16.mxu0 0
        %751 = vmatpush1.bf16.msra.mxu0 0
        %752 = vmatprep.subr.bf16.mxu0 0
        %753 = vmatpush1.bf16.msra.mxu0 0
        %754 = vmatprep.subr.bf16.mxu0 0
        %755 = vmatpush1.bf16.msra.mxu0 0
        %756 = vmatprep.subr.bf16.mxu0 0
        %757 = vmatpush1.bf16.msra.mxu0 0
        %758 = vmatprep.subr.bf16.mxu0 0
        %759 = vmatpush1.bf16.msra.mxu0 0
        %760 = vmatprep.subr.bf16.mxu0 0
        %761 = vmatpush1.bf16.msra.mxu0 0
        %762 = vmatprep.subr.bf16.mxu0 0
        %763 = vmatpush1.bf16.msra.mxu0 0
        %764 = vmatprep.subr.bf16.mxu0 0
        %765 = vmatpush1.bf16.msra.mxu0 0
        %766 = vmatprep.subr.bf16.mxu0 0
        %767 = vmatpush1.bf16.msra.mxu0 0
        %768 = vmatprep.subr.bf16.mxu0 0
        %769 = vmatpush1.bf16.msra.mxu0 0
        %770 = vmatprep.subr.bf16.mxu0 0
        %771 = vmatpush1.bf16.msra.mxu0 0
        %772 = vmatprep.subr.bf16.mxu0 0
        %773 = vmatpush1.bf16.msra.mxu0 0
        %774 = vmatprep.mubr.bf16.mxu0 0
        %775 = vmatmul.mubr.bf16.gmra.mrb[0].mxu0 %v734
        %v776 = vpop.f32.mrb[0].mxu0
        %v777 = vadd.f32 0.0, %v776
        %v778 = vpop.f32.mrb[0].mxu0
        %v779 = vadd.f32 0.0, %v778
        %v780 = vpop.f32.mrb[0].mxu0
        %v781 = vpop.f32.mrb[0].mxu0
        %782 = vdwg.mxu0
        %vm783 = vmand %vm705, %vm517
        %vm784 = vmand %vm783, %vm523
        %v785 = vsel %vm784, 1, 0
        %v786 = vlaneseq
        %v787 = vshrl.u32 %v786, 7
        %v788 = vsub.s32 0, %v787
        %v789 = vrot.slane %v785, %v788
        %v790 = vlaneseq
        %v791 = vshrl.u32 %v790, 7
        %v792 = vsub.s32 2, %v791
        %v793 = vrot.slane %v785, %v792
        %v794 = vlaneseq
        %v795 = vshrl.u32 %v794, 7
        %v796 = vsub.s32 0, %v795
        %v797 = vrot.slane %v789, %v796
        %v798 = vlaneseq
        %v799 = vshrl.u32 %v798, 7
        %v800 = vsub.s32 0, %v799
        %v801 = vrot.slane %v793, %v800
        %vm802 = vcmp.eq.s32.totalorder %v797, 1
        %vm803 = vcmp.eq.s32.totalorder %v801, 1
        %v804 = vsel %vm802, %v777, 0.0
        %v805 = vsel %vm803, %v779, 0.0
        %v806 = vadd.f32 %v729, %v804
        %v807 = vadd.f32 %v730, %v805
        %808 = vrot.lane.b32.xlu0 %v352, 127
        %v809 = vpop.permute.xlu0 %808
        %810 = vrot.lane.b32.xlu0 %v353, 127
        %v811 = vpop.permute.xlu0 %810
        %vm812 = vcmask 1039360
        %v813 = vsel %vm812, %v809, %v811
        %vm814 = vcmask 1039360
        %v817 = vsel %vm814, %v811, %v809
        %s818 = scalar_lea.vmem %s2, 20
        %v819 = vld [vmem:[%s818] sm:$0xf]
        %v821 = vsel %vm365, %v819, 0
        %v824 = vsel %vm369, %v813, 0
        %v826 = vsel %vm369, %v817, 0
        %828 = vmatprep.subr.bf16.mxu0 %v826
        %829 = vmatpush1.bf16.msra.mxu0 %v824
        %830 = vmatprep.subr.bf16.mxu0 0
        %831 = vmatpush1.bf16.msra.mxu0 0
        %832 = vmatprep.subr.bf16.mxu0 0
        %833 = vmatpush1.bf16.msra.mxu0 0
        %834 = vmatprep.subr.bf16.mxu0 0
        %835 = vmatpush1.bf16.msra.mxu0 0
        %836 = vmatprep.subr.bf16.mxu0 0
        %837 = vmatpush1.bf16.msra.mxu0 0
        %838 = vmatprep.subr.bf16.mxu0 0
        %839 = vmatpush1.bf16.msra.mxu0 0
        %840 = vmatprep.subr.bf16.mxu0 0
        %841 = vmatpush1.bf16.msra.mxu0 0
        %842 = vmatprep.subr.bf16.mxu0 0
        %843 = vmatpush1.bf16.msra.mxu0 0
        %844 = vmatprep.subr.bf16.mxu0 0
        %845 = vmatpush1.bf16.msra.mxu0 0
        %846 = vmatprep.subr.bf16.mxu0 0
        %847 = vmatpush1.bf16.msra.mxu0 0
        %848 = vmatprep.subr.bf16.mxu0 0
        %849 = vmatpush1.bf16.msra.mxu0 0
        %850 = vmatprep.subr.bf16.mxu0 0
        %851 = vmatpush1.bf16.msra.mxu0 0
        %852 = vmatprep.subr.bf16.mxu0 0
        %853 = vmatpush1.bf16.msra.mxu0 0
        %854 = vmatprep.subr.bf16.mxu0 0
        %855 = vmatpush1.bf16.msra.mxu0 0
        %856 = vmatprep.subr.bf16.mxu0 0
        %857 = vmatpush1.bf16.msra.mxu0 0
        %858 = vmatprep.subr.bf16.mxu0 0
        %859 = vmatpush1.bf16.msra.mxu0 0
        %860 = vmatprep.mubr.bf16.mxu0 0
        %861 = vmatmul.mubr.bf16.gmra.mrb[0].mxu0 %v821
        %v862 = vpop.f32.mrb[0].mxu0
        %v863 = vadd.f32 0.0, %v862
        %v864 = vpop.f32.mrb[0].mxu0
        %v865 = vadd.f32 0.0, %v864
        %v866 = vpop.f32.mrb[0].mxu0
        %v867 = vpop.f32.mrb[0].mxu0
        %868 = vdwg.mxu0
        %vm869 = vmand %vm705, %vm613
        %vm870 = vmand %vm869, %vm619
        %v871 = vsel %vm870, 1, 0
        %v872 = vlaneseq
        %v873 = vshrl.u32 %v872, 7
        %v874 = vsub.s32 0, %v873
        %v875 = vrot.slane %v871, %v874
        %v876 = vlaneseq
        %v877 = vshrl.u32 %v876, 7
        %v878 = vsub.s32 2, %v877
        %v879 = vrot.slane %v871, %v878
        %v880 = vlaneseq
        %v881 = vshrl.u32 %v880, 7
        %v882 = vsub.s32 0, %v881
        %v883 = vrot.slane %v875, %v882
        %v884 = vlaneseq
        %v885 = vshrl.u32 %v884, 7
        %v886 = vsub.s32 0, %v885
        %v887 = vrot.slane %v879, %v886
        %vm888 = vcmp.eq.s32.totalorder %v883, 1
        %vm889 = vcmp.eq.s32.totalorder %v887, 1
        %v890 = vsel %vm888, %v863, 0.0
        %v891 = vsel %vm889, %v865, 0.0
        %v892 = vadd.f32 %v806, %v890
        %v893 = vadd.f32 %v807, %v891
        %894 = vrot.lane.b32.xlu0 %v352, 113
        %v895 = vpop.permute.xlu0 %894
        %896 = vrot.lane.b32.xlu0 %v353, 113
        %v897 = vpop.permute.xlu0 %896
        %vm898 = vcmask 924672
        %v899 = vsel %vm898, %v895, %v897
        %vm900 = vcmask 924672
        %v903 = vsel %vm900, %v897, %v895
        %s904 = scalar_lea.vmem %s2, 24
        %v905 = vld [vmem:[%s904] sm:$0xf]
        %v907 = vsel %vm365, %v905, 0
        %v910 = vsel %vm369, %v899, 0
        %v912 = vsel %vm369, %v903, 0
        %914 = vmatprep.subr.bf16.mxu0 %v912
        %915 = vmatpush1.bf16.msra.mxu0 %v910
        %916 = vmatprep.subr.bf16.mxu0 0
        %917 = vmatpush1.bf16.msra.mxu0 0
        %918 = vmatprep.subr.bf16.mxu0 0
        %919 = vmatpush1.bf16.msra.mxu0 0
        %920 = vmatprep.subr.bf16.mxu0 0
        %921 = vmatpush1.bf16.msra.mxu0 0
        %922 = vmatprep.subr.bf16.mxu0 0
        %923 = vmatpush1.bf16.msra.mxu0 0
        %924 = vmatprep.subr.bf16.mxu0 0
        %925 = vmatpush1.bf16.msra.mxu0 0
        %926 = vmatprep.subr.bf16.mxu0 0
        %927 = vmatpush1.bf16.msra.mxu0 0
        %928 = vmatprep.subr.bf16.mxu0 0
        %929 = vmatpush1.bf16.msra.mxu0 0
        %930 = vmatprep.subr.bf16.mxu0 0
        %931 = vmatpush1.bf16.msra.mxu0 0
        %932 = vmatprep.subr.bf16.mxu0 0
        %933 = vmatpush1.bf16.msra.mxu0 0
        %934 = vmatprep.subr.bf16.mxu0 0
        %935 = vmatpush1.bf16.msra.mxu0 0
        %936 = vmatprep.subr.bf16.mxu0 0
        %937 = vmatpush1.bf16.msra.mxu0 0
        %938 = vmatprep.subr.bf16.mxu0 0
        %939 = vmatpush1.bf16.msra.mxu0 0
        %940 = vmatprep.subr.bf16.mxu0 0
        %941 = vmatpush1.bf16.msra.mxu0 0
        %942 = vmatprep.subr.bf16.mxu0 0
        %943 = vmatpush1.bf16.msra.mxu0 0
        %944 = vmatprep.subr.bf16.mxu0 0
        %945 = vmatpush1.bf16.msra.mxu0 0
        %946 = vmatprep.mubr.bf16.mxu0 0
        %947 = vmatmul.mubr.bf16.gmra.mrb[0].mxu0 %v907
        %v948 = vpop.f32.mrb[0].mxu0
        %v949 = vadd.f32 0.0, %v948
        %v950 = vpop.f32.mrb[0].mxu0
        %v951 = vadd.f32 0.0, %v950
        %v952 = vpop.f32.mrb[0].mxu0
        %v953 = vpop.f32.mrb[0].mxu0
        %954 = vdwg.mxu0
        %vm955 = vmand %vm609, %vm615
        %vm956 = vmand %vm955, %vm422
        %vm957 = vmand %vm956, %vm427
        %v958 = vsel %vm957, 1, 0
        %v959 = vlaneseq
        %v960 = vshrl.u32 %v959, 7
        %v961 = vsub.s32 0, %v960
        %v962 = vrot.slane %v958, %v961
        %v963 = vlaneseq
        %v964 = vshrl.u32 %v963, 7
        %v965 = vsub.s32 2, %v964
        %v966 = vrot.slane %v958, %v965
        %v967 = vlaneseq
        %v968 = vshrl.u32 %v967, 7
        %v969 = vsub.s32 0, %v968
        %v970 = vrot.slane %v962, %v969
        %v971 = vlaneseq
        %v972 = vshrl.u32 %v971, 7
        %v973 = vsub.s32 0, %v972
        %v974 = vrot.slane %v966, %v973
        %vm975 = vcmp.eq.s32.totalorder %v970, 1
        %vm976 = vcmp.eq.s32.totalorder %v974, 1
        %v977 = vsel %vm975, %v949, 0.0
        %v978 = vsel %vm976, %v951, 0.0
        %v979 = vadd.f32 %v892, %v977
        %v980 = vadd.f32 %v893, %v978
        %981 = vrot.lane.b32.xlu0 %v352, 112
        %v982 = vpop.permute.xlu0 %981
        %983 = vrot.lane.b32.xlu0 %v353, 112
        %v984 = vpop.permute.xlu0 %983
        %vm985 = vcmask 916480
        %v986 = vsel %vm985, %v982, %v984
        %vm987 = vcmask 916480
        %v990 = vsel %vm987, %v984, %v982
        %s991 = scalar_lea.vmem %s2, 28
        %v992 = vld [vmem:[%s991] sm:$0xf]
        %v994 = vsel %vm365, %v992, 0
        %v997 = vsel %vm369, %v986, 0
        %v999 = vsel %vm369, %v990, 0
        %1001 = vmatprep.subr.bf16.mxu0 %v999
        %1002 = vmatpush1.bf16.msra.mxu0 %v997
        %1003 = vmatprep.subr.bf16.mxu0 0
        %1004 = vmatpush1.bf16.msra.mxu0 0
        %1005 = vmatprep.subr.bf16.mxu0 0
        %1006 = vmatpush1.bf16.msra.mxu0 0
        %1007 = vmatprep.subr.bf16.mxu0 0
        %1008 = vmatpush1.bf16.msra.mxu0 0
        %1009 = vmatprep.subr.bf16.mxu0 0
        %1010 = vmatpush1.bf16.msra.mxu0 0
        %1011 = vmatprep.subr.bf16.mxu0 0
        %1012 = vmatpush1.bf16.msra.mxu0 0
        %1013 = vmatprep.subr.bf16.mxu0 0
        %1014 = vmatpush1.bf16.msra.mxu0 0
        %1015 = vmatprep.subr.bf16.mxu0 0
        %1016 = vmatpush1.bf16.msra.mxu0 0
        %1017 = vmatprep.subr.bf16.mxu0 0
        %1018 = vmatpush1.bf16.msra.mxu0 0
        %1019 = vmatprep.subr.bf16.mxu0 0
        %1020 = vmatpush1.bf16.msra.mxu0 0
        %1021 = vmatprep.subr.bf16.mxu0 0
        %1022 = vmatpush1.bf16.msra.mxu0 0
        %1023 = vmatprep.subr.bf16.mxu0 0
        %1024 = vmatpush1.bf16.msra.mxu0 0
        %1025 = vmatprep.subr.bf16.mxu0 0
        %1026 = vmatpush1.bf16.msra.mxu0 0
        %1027 = vmatprep.subr.bf16.mxu0 0
        %1028 = vmatpush1.bf16.msra.mxu0 0
        %1029 = vmatprep.subr.bf16.mxu0 0
        %1030 = vmatpush1.bf16.msra.mxu0 0
        %1031 = vmatprep.subr.bf16.mxu0 0
        %1032 = vmatpush1.bf16.msra.mxu0 0
        %1033 = vmatprep.mubr.bf16.mxu0 0
        %1034 = vmatmul.mubr.bf16.gmra.mrb[0].mxu0 %v994
        %v1035 = vpop.f32.mrb[0].mxu0
        %v1036 = vadd.f32 0.0, %v1035
        %v1037 = vpop.f32.mrb[0].mxu0
        %v1038 = vadd.f32 0.0, %v1037
        %v1039 = vpop.f32.mrb[0].mxu0
        %v1040 = vpop.f32.mrb[0].mxu0
        %1041 = vdwg.mxu0
        %vm1042 = vmand %vm955, %vm517
        %vm1043 = vmand %vm1042, %vm523
        %v1044 = vsel %vm1043, 1, 0
        %v1045 = vlaneseq
        %v1046 = vshrl.u32 %v1045, 7
        %v1047 = vsub.s32 0, %v1046
        %v1048 = vrot.slane %v1044, %v1047
        %v1049 = vlaneseq
        %v1050 = vshrl.u32 %v1049, 7
        %v1051 = vsub.s32 2, %v1050
        %v1052 = vrot.slane %v1044, %v1051
        %v1053 = vlaneseq
        %v1054 = vshrl.u32 %v1053, 7
        %v1055 = vsub.s32 0, %v1054
        %v1056 = vrot.slane %v1048, %v1055
        %v1057 = vlaneseq
        %v1058 = vshrl.u32 %v1057, 7
        %v1059 = vsub.s32 0, %v1058
        %v1060 = vrot.slane %v1052, %v1059
        %vm1061 = vcmp.eq.s32.totalorder %v1056, 1
        %vm1062 = vcmp.eq.s32.totalorder %v1060, 1
        %v1063 = vsel %vm1061, %v1036, 0.0
        %v1064 = vsel %vm1062, %v1038, 0.0
        %v1065 = vadd.f32 %v979, %v1063
        %v1066 = vadd.f32 %v980, %v1064
        %1067 = vrot.lane.b32.xlu0 %v352, 111
        %v1068 = vpop.permute.xlu0 %1067
        %1069 = vrot.lane.b32.xlu0 %v353, 111
        %v1070 = vpop.permute.xlu0 %1069
        %vm1071 = vcmask 908288
        %v1072 = vsel %vm1071, %v1068, %v1070
        %vm1073 = vcmask 908288
        %v1076 = vsel %vm1073, %v1070, %v1068
        %s1077 = scalar_lea.vmem %s2, 32
        %v1078 = vld [vmem:[%s1077] sm:$0xf]
        %v1080 = vsel %vm365, %v1078, 0
        %v1083 = vsel %vm369, %v1072, 0
        %v1085 = vsel %vm369, %v1076, 0
        %1087 = vmatprep.subr.bf16.mxu0 %v1085
        %1088 = vmatpush1.bf16.msra.mxu0 %v1083
        %1089 = vmatprep.subr.bf16.mxu0 0
        %1090 = vmatpush1.bf16.msra.mxu0 0
        %1091 = vmatprep.subr.bf16.mxu0 0
        %1092 = vmatpush1.bf16.msra.mxu0 0
        %1093 = vmatprep.subr.bf16.mxu0 0
        %1094 = vmatpush1.bf16.msra.mxu0 0
        %1095 = vmatprep.subr.bf16.mxu0 0
        %1096 = vmatpush1.bf16.msra.mxu0 0
        %1097 = vmatprep.subr.bf16.mxu0 0
        %1098 = vmatpush1.bf16.msra.mxu0 0
        %1099 = vmatprep.subr.bf16.mxu0 0
        %1100 = vmatpush1.bf16.msra.mxu0 0
        %1101 = vmatprep.subr.bf16.mxu0 0
        %1102 = vmatpush1.bf16.msra.mxu0 0
        %1103 = vmatprep.subr.bf16.mxu0 0
        %1104 = vmatpush1.bf16.msra.mxu0 0
        %1105 = vmatprep.subr.bf16.mxu0 0
        %1106 = vmatpush1.bf16.msra.mxu0 0
        %1107 = vmatprep.subr.bf16.mxu0 0
        %1108 = vmatpush1.bf16.msra.mxu0 0
        %1109 = vmatprep.subr.bf16.mxu0 0
        %1110 = vmatpush1.bf16.msra.mxu0 0
        %1111 = vmatprep.subr.bf16.mxu0 0
        %1112 = vmatpush1.bf16.msra.mxu0 0
        %1113 = vmatprep.subr.bf16.mxu0 0
        %1114 = vmatpush1.bf16.msra.mxu0 0
        %1115 = vmatprep.subr.bf16.mxu0 0
        %1116 = vmatpush1.bf16.msra.mxu0 0
        %1117 = vmatprep.subr.bf16.mxu0 0
        %1118 = vmatpush1.bf16.msra.mxu0 0
        %1119 = vmatprep.mubr.bf16.mxu0 0
        %1120 = vmatmul.mubr.bf16.gmra.mrb[0].mxu0 %v1080
        %v1121 = vpop.f32.mrb[0].mxu0
        %v1122 = vadd.f32 0.0, %v1121
        %v1123 = vpop.f32.mrb[0].mxu0
        %v1124 = vadd.f32 0.0, %v1123
        %v1125 = vpop.f32.mrb[0].mxu0
        %v1126 = vpop.f32.mrb[0].mxu0
        %1127 = vdwg.mxu0
        %vm1128 = vmand %vm955, %vm613
        %vm1129 = vmand %vm1128, %vm619
        %v1130 = vsel %vm1129, 1, 0
        %v1131 = vlaneseq
        %v1132 = vshrl.u32 %v1131, 7
        %v1133 = vsub.s32 0, %v1132
        %v1134 = vrot.slane %v1130, %v1133
        %v1135 = vlaneseq
        %v1136 = vshrl.u32 %v1135, 7
        %v1137 = vsub.s32 2, %v1136
        %v1138 = vrot.slane %v1130, %v1137
        %v1139 = vlaneseq
        %v1140 = vshrl.u32 %v1139, 7
        %v1141 = vsub.s32 0, %v1140
        %v1142 = vrot.slane %v1134, %v1141
        %v1143 = vlaneseq
        %v1144 = vshrl.u32 %v1143, 7
        %v1145 = vsub.s32 0, %v1144
        %v1146 = vrot.slane %v1138, %v1145
        %vm1147 = vcmp.eq.s32.totalorder %v1142, 1
        %vm1148 = vcmp.eq.s32.totalorder %v1146, 1
        %v1149 = vsel %vm1147, %v1122, 0.0
        %v1150 = vsel %vm1148, %v1124, 0.0
        %v1151 = vadd.f32 %v1065, %v1149
        %v1152 = vadd.f32 %v1066, %v1150
        %v1153 = vld [vmem:[%s3] sm:$0xff]
        %1155 = vset.pattern.permute.xlu0 0
        %1156 = vperm.xlu0 %1155, %v1153
        %v1157 = vpop.permute.xlu0 %1156
        %v1159 = vadd.f32 %v1151, %v1157
        %v1160 = vadd.f32 %v1152, %v1157
        %v1161 = vmul.f32 %v1159, %v1159
        %v1162 = vmul.f32 %v1160, %v1160
        %v1163 = vrot.slane %v1161, 4
        %v1164 = vadd.f32 %v1161, %v1163
        %v1165 = vrot.slane %v1164, 2
        %v1166 = vadd.f32 %v1164, %v1165
        %v1167 = vrot.slane %v1166, 1
        %v1168 = vadd.f32 %v1166, %v1167
        %v1169 = vrot.slane %v1162, 4
        %v1170 = vadd.f32 %v1162, %v1169
        %v1171 = vrot.slane %v1170, 2
        %v1172 = vadd.f32 %v1170, %v1171
        %v1173 = vrot.slane %v1172, 1
        %v1174 = vadd.f32 %v1172, %v1173
        %v1175 = vrsqrt.pop %v1168
        %v1176 = vrsqrt.pop %v1174
        %v1177 = vmin.f32 %v1175, 1e+12
        %v1178 = vmin.f32 %v1176, 1e+12
        %v1179 = vmul.f32 %v1177, 2.828427
        %v1180 = vmul.f32 %v1178, 2.828427
        %v1181 = vmul.f32 %v1159, %v1179
        %v1182 = vmul.f32 %v1160, %v1180
        %v1183 = vld [vmem:[%s4] sm:$0xff]
        %1185 = vset.pattern.permute.xlu0 0
        %1186 = vperm.xlu0 %1185, %v1183
        %v1187 = vpop.permute.xlu0 %1186
        %v1189 = vmul.f32 %v1181, %v1187
        %v1190 = vmul.f32 %v1182, %v1187
        %v1191 = vld [vmem:[%s336] sm:$0xff]
        %v1192 = vadd.f32 %v1191, 1.0
        %1194 = vset.pattern.permute.xlu0 0
        %1195 = vperm.xlu0 %1194, %v1192
        %v1196 = vpop.permute.xlu0 %1195
        %v1198 = vmul.f32 %v1189, %v1196
        %v1199 = vmul.f32 %v1190, %v1196
        %v1200 = vld [vmem:[%s340] sm:$0xff]
        %1202 = vset.pattern.permute.xlu0 0
        %1203 = vperm.xlu0 %1202, %v1200
        %v1204 = vpop.permute.xlu0 %1203
        %v1206 = vadd.f32 %v1198, %v1204
        %v1207 = vadd.f32 %v1199, %v1204
        %v1208 = vxor.u32 %v1206, 2147483648
        %v1209 = vxor.u32 %v1207, 2147483648
        %v1210 = vmul.f32 %v1208, 1.442695
        %v1211 = vpow.pop %v1210
        %v1212 = vmul.f32 %v1209, 1.442695
        %v1213 = vpow.pop %v1212
        %v1214 = vadd.f32 %v1211, 1.0
        %v1215 = vadd.f32 %v1213, 1.0
        %v1216 = vrcp.pop %v1214
        %v1217 = vmul.f32 1.0, %v1216
        %v1218 = vrcp.pop %v1215
        %v1219 = vmul.f32 1.0, %v1218
        %v1220 = vmul.f32 %v1206, %v1217
        %v1221 = vmul.f32 %v1207, %v1219
        %1222 = vst [vmem:[%s322] sm:$0xff] %v1220
        %1223 = vst [vmem:[%s322 + $0x8] sm:$0xff] %v1221
        %s1224 = sand.u32 %s207, 1
        %s1225 = scalar_lea.sflag [#allocation3], %s1224
        %s1226 = sand.u32 %s207, 1
        %s1227 = smul.addr %s1226, 16
        %s1228 = scalar_lea.vmem [#allocation2], %s1227
        // Predicated region
        $region49: #{tpu_custom_call.1} parent=47 // pred_check
          %p1229 = pneg %p217
        $region50: #{tpu_custom_call.1} parent=47 // pred_check_branch
          %1231 = sbr.rel (%p1229) target = $region52
        $region51: #{tpu_custom_call.1} parent=47 // pred_region
          %s1232 = smul.u32 2, %s26
          %s1234 = ssub.s32 256, 256
          %1235 = vsyncadd %s1225, %s1234
          %s1236 = smul.addr %s25, 6
          %s1237 = sadd.s32 %s1232, %s1236
          %s1238 = smul.addr %s1237, 128
          %s1239 = scalar_lea.hbm %s7, %s1238
          %s1241 = sshll.u32 %s1228, 4
          %s1242 = int_to_ptr.vmem [resolvable:$true] %s1241
          %1244 = dma.vmem_to_hbm [thread:$0]  %s1242, 256, %s1239, %s1225
        $region52: #{tpu_custom_call.1} parent=47 // pred_fallthru
          _
      $region48: #{tpu_custom_call.1} parent=5 // pred_fallthru
        _
      %p1245 = scmp.le.s32.totalorder 2, %s16
      // Predicated region
      $region53: #{tpu_custom_call.1} parent=5 // pred_check
        %p1246 = pneg %p1245
      $region54: #{tpu_custom_call.1} parent=5 // pred_check_branch
        %1248 = sbr.rel (%p1246) target = $region56
      $region55: #{tpu_custom_call.1} parent=5 // pred_region
        %s1249 = ssub.s32 %s16, 2
        // Predicated region
        $region57: #{tpu_custom_call.1} parent=55 // pred_check
          %p1250 = pneg %p223
        $region58: #{tpu_custom_call.1} parent=55 // pred_check_branch
          %1252 = sbr.rel (%p1250) target = $region60
        $region59: #{tpu_custom_call.1} parent=55 // pred_region
          %s1253 = sand.u32 %s208, 1
          %s1254 = scalar_lea.sflag [#allocation3], %s1253
          %s1255 = sand.u32 %s208, 1
          %s1256 = smul.addr %s1255, 16
          %s1257 = scalar_lea.vmem [#allocation2], %s1256
          %1258 = dma.done %s1254, 256
        $region60: #{tpu_custom_call.1} parent=55 // pred_fallthru
          _
      $region56: #{tpu_custom_call.1} parent=5 // pred_fallthru
        _
    $region6: #{tpu_custom_call.1} parent=1 // loop_footer
      %s20 = sadd.s32 1, %s16
    $region7: #{tpu_custom_call.1} parent=1 // loop_footer_branch
      %15 = sbr.rel target = $region3
    $region8: #{tpu_custom_call.1} parent=1 // loop_exit
      _
    %1259 = vsyncpa [#allocation3], 1
    %s1260 = scalar_lea.sflag [#allocation3], 1
    %1261 = vsyncpa %s1260, 1

</llo_original>
